<compile_context>
chip_gen: v7x
topology: tpu7x:2x2x1
jax: 0.10.0
libtpu: 0.0.40
codegen_flags: <defaults>
</compile_context>

<pallas_src>
import functools

import jax
import jax.numpy as jnp
from jax import lax
from jax.experimental import pallas as pl
from jax.experimental.pallas import tpu as pltpu

_LP = 8  # left halo padded to a full sublane group -> aligned interior scratch store


# ----------------------------------------------------------------------------
# Small shape / config helpers
# ----------------------------------------------------------------------------
def _out_hw(H, W, stride):
    if stride == 1:
        return H, W
    return (H - 1) // 2 + 1, (W - 1) // 2 + 1


def _pad_dims(H, W):
    Hp = H + 2 + (H % 2)          # top/bottom halo (+1 so stride-2 row bands fit odd H)
    Wp = _LP + W + 2              # aligned left halo + right halo + strided-load slack
    return Hp, Wp


@functools.lru_cache(maxsize=None)
def _vmem_limit_bytes():
    # Re-derive the scoped-VMEM cap per generation (v7x: 64 MiB/TC, v5e/v6e: 128 MiB).
    try:
        cap = int(pltpu.get_tpu_info().vmem_capacity_bytes)
    except Exception:
        cap = 64 * 1024 * 1024
    return max(32 * 1024 * 1024, min(cap * 7 // 8, 100 * 1024 * 1024))


def _compiler_params():
    return pltpu.CompilerParams(
        dimension_semantics=("parallel",),       # batch grid steps are fully independent
        vmem_limit_bytes=_vmem_limit_bytes())


# ----------------------------------------------------------------------------
# In-kernel helpers
# ----------------------------------------------------------------------------
def _zero_halo(pad_ref, H, W):
    """Zero ONLY the halo strips; the interior is overwritten every grid step."""
    Hp, Wp, C = pad_ref.shape
    pad_ref[0:1, :, :] = jnp.zeros((1, Wp, C), jnp.float32)
    pad_ref[H + 1:, :, :] = jnp.zeros((Hp - (H + 1), Wp, C), jnp.float32)
    pad_ref[:, 0:_LP, :] = jnp.zeros((Hp, _LP, C), jnp.float32)
    pad_ref[:, _LP + W:, :] = jnp.zeros((Hp, Wp - (_LP + W), C), jnp.float32)


def _dw3x3(pad_ref, wd, *, H, W, stride):
    """3x3 depthwise conv (stride 1 or 2) over the zero-haloed scratch.

    pad_ref : (Hp, Wp, C) f32, interior at rows [1, H+1), cols [_LP, _LP+W).
    wd      : (3, 3, C) f32 value.
    Returns (Hz, Wz, C) f32. For stride=2, H and W decimation happen in-kernel
    (rows via even/odd band reshape, cols via a sublane-strided ref load).
    """
    C = pad_ref.shape[-1]
    Hz, Wz = _out_hw(H, W, stride)
    z = jnp.zeros((Hz, Wz, C), jnp.float32)
    for kh in range(3):
        for kw in range(3):
            c0 = _LP - 1 + kw
            if stride == 1:
                win = pad_ref[kh:kh + Hz, c0:c0 + Wz, :]
            else:
                band = pad_ref[kh:kh + 2 * Hz, pl.ds(c0, Wz, stride=2), :]
                win = band.reshape(Hz, 2, Wz, C)[:, 0]        # rows kh, kh+2, ...
            z = z + win * wd[kh, kw].reshape(1, 1, C)
    # TODO(synk): strip-mine this accumulation over 8-row bands (lax.fori_loop,
    # unroll=True) to bound vreg live ranges for large W on v5e.
    return z


# ----------------------------------------------------------------------------
# Kernel: benchmodel = 1 (basic unit, stride 1)
# ----------------------------------------------------------------------------
def _unit1_kernel(x_ref, w1_ref, b1_ref, wd_ref, w2_ref, b2_ref, o_ref, pad_ref,
                  *, H, W):
    # x_ref : (1, 2c, H*W) channel-major input (NCHW flattened)
    # w1_ref: (c, c)  bf16 pw1 weight with BN scale folded ; b1_ref: (1, c) f32 shift
    # wd_ref: (3,3,c) f32 depthwise weight
    # w2_ref: (c, c)  bf16 pw2 weight with dw-BN + pw2-BN folded ; b2_ref: (1, c) f32
    # o_ref : (1, c, 2*H*W) ; lanes [0,HW) = passthrough branch, [HW,2HW) = branch2.
    #         The wrapper's free reshape to (N, 2c, H, W) realises channel_shuffle(2).
    HW = H * W
    c = x_ref.shape[1] // 2
    _zero_halo(pad_ref, H, W)

    x1 = x_ref[0, :c, :]                                    # (c, HW) passthrough
    x2t = x_ref[0, c:, :].T                                 # (HW, c)

    # pw1 (+BN +ReLU), bf16 MXU operands, f32 accumulation
    y1 = jnp.dot(x2t.astype(jnp.bfloat16), w1_ref[...],
                 preferred_element_type=jnp.float32) + b1_ref[...]
    y1 = jnp.maximum(y1, 0.0)
    pad_ref[1:H + 1, _LP:_LP + W, :] = y1.reshape(H, W, c)  # aligned interior store

    z = _dw3x3(pad_ref, wd_ref[...], H=H, W=W, stride=1)

    # pw2 (+folded dw-BN / pw2-BN +ReLU)
    y2 = jnp.dot(z.reshape(HW, c).astype(jnp.bfloat16), w2_ref[...],
                 preferred_element_type=jnp.float32) + b2_ref[...]
    y2 = jnp.maximum(y2, 0.0)

    # Lane-dense, shuffle-ready output: two dense stores at 128-aligned lane offsets.
    o_ref[0, :, :HW] = x1.astype(o_ref.dtype)
    o_ref[0, :, HW:] = y2.T.astype(o_ref.dtype)


# ----------------------------------------------------------------------------
# Kernel: benchmodel = 2 (downsample unit, both branches fused)
# ----------------------------------------------------------------------------
def _unit2_kernel(x_ref, w1_ref, b1_ref, wda_ref, wdb_ref, wa_ref, wb_ref, bo_ref,
                  o_ref, pada_ref, padb_ref, *, H, W, stride):
    # x_ref : (1, Cin, H*W) channel-major input (shared by both branches)
    # w1_ref: (Cin, Cm) bf16 ; b1_ref: (1, Cm) f32        branch2 pw1 (BN folded)
    # wda   : (3,3,Cin) f32 ; wdb: (3,3,Cm) f32           depthwise weights (b1 / b2)
    # wa    : (Cin, 2c) bf16 ; wb: (Cm, 2c) bf16          final 1x1 weights, dw-BN and
    #         pw-BN folded, concat+channel_shuffle baked into the interleaved columns
    # bo    : (1, 2c) f32                                  folded interleaved bias
    # o_ref : (1, 2c, Hz*Wz) already-shuffled output (wrapper reshape -> NCHW is free)
    Cin = x_ref.shape[1]
    Cm = w1_ref.shape[1]
    Hz, Wz = _out_hw(H, W, stride)

    _zero_halo(pada_ref, H, W)
    _zero_halo(padb_ref, H, W)

    xt = x_ref[0].T                                          # (HW, Cin) f32
    pada_ref[1:H + 1, _LP:_LP + W, :] = xt.reshape(H, W, Cin)   # branch1 dw input

    # branch2 pw1 (+BN +ReLU)
    y1 = jnp.dot(xt.astype(jnp.bfloat16), w1_ref[...],
                 preferred_element_type=jnp.float32) + b1_ref[...]
    y1 = jnp.maximum(y1, 0.0)
    padb_ref[1:H + 1, _LP:_LP + W, :] = y1.reshape(H, W, Cm)

    # depthwise 3x3 of both branches (stride + decimation fully in-kernel)
    z1 = _dw3x3(pada_ref, wda_ref[...], H=H, W=W, stride=stride)
    z2 = _dw3x3(padb_ref, wdb_ref[...], H=H, W=W, stride=stride)

    # final 1x1 convs of both branches; channel shuffle comes out of the weight columns
    y = (jnp.dot(z1.reshape(Hz * Wz, Cin).astype(jnp.bfloat16), wa_ref[...],
                 preferred_element_type=jnp.float32)
         + jnp.dot(z2.reshape(Hz * Wz, Cm).astype(jnp.bfloat16), wb_ref[...],
                   preferred_element_type=jnp.float32)
         + bo_ref[...])
    y = jnp.maximum(y, 0.0)
    o_ref[0] = y.T.astype(o_ref.dtype)                       # (2c, Hz*Wz)


# ----------------------------------------------------------------------------
# pallas_call wrappers (weight folding happens host/XLA-side on tiny tensors)
# ----------------------------------------------------------------------------
def _unit1_call(x2d, p, H, W):
    N, C2, HW = x2d.shape
    c = C2 // 2
    Hp, Wp = _pad_dims(H, W)

    w1 = (jnp.transpose(p["w1"]) * p["s1"][None, :]).astype(jnp.bfloat16)      # (c, c)
    b1 = p["b1"].reshape(1, c).astype(jnp.float32)
    wd = jnp.transpose(p["wd"], (1, 2, 0)).astype(jnp.float32)                 # (3,3,c)
    w3t = jnp.transpose(p["w3"])                                               # (c, c)
    w2 = (p["s2"][:, None] * w3t * p["s3"][None, :]).astype(jnp.bfloat16)
    b2 = ((p["b2"] @ w3t) * p["s3"] + p["b3"]).reshape(1, c).astype(jnp.float32)

    flops = N * (4 * HW * c * c + 18 * HW * c)
    bytes_accessed = (4 * (x2d.size + N * c * 2 * HW + wd.size + b1.size + b2.size)
                      + 2 * (w1.size + w2.size))

    return pl.pallas_call(
        functools.partial(_unit1_kernel, H=H, W=W),
        out_shape=jax.ShapeDtypeStruct((N, c, 2 * HW), jnp.float32),
        grid=(N,),
        in_specs=[
            pl.BlockSpec((1, C2, HW), lambda n: (n, 0, 0)),
            pl.BlockSpec((c, c), lambda n: (0, 0)),        # weights / folded BN stay
            pl.BlockSpec((1, c), lambda n: (0, 0)),        # VMEM-resident (constant maps)
            pl.BlockSpec((3, 3, c), lambda n: (0, 0, 0)),
            pl.BlockSpec((c, c), lambda n: (0, 0)),
            pl.BlockSpec((1, c), lambda n: (0, 0)),
        ],
        out_specs=pl.BlockSpec((1, c, 2 * HW), lambda n: (n, 0, 0)),
        scratch_shapes=[pltpu.VMEM((Hp, Wp, c), jnp.float32)],
        compiler_params=_compiler_params(),
        cost_estimate=pl.CostEstimate(flops=flops, transcendentals=0,
                                      bytes_accessed=bytes_accessed),
    )(x2d, w1, b1, wd, w2, b2)


def _unit2_call(x2d, p1, p2, H, W, stride):
    N, Cin, HW = x2d.shape
    c = p2["w3"].shape[0]           # oup_inc
    Cm = p2["w1"].shape[0]          # branch2 mid channels (= oup_inc)
    Hz, Wz = _out_hw(H, W, stride)
    Hp, Wp = _pad_dims(H, W)

    # branch2 pw1 (+BN folded into the weight)
    w1 = (jnp.transpose(p2["w1"]) * p2["s1"][None, :]).astype(jnp.bfloat16)    # (Cin, Cm)
    b1 = p2["b1"].reshape(1, Cm).astype(jnp.float32)
    # depthwise weights
    wda = jnp.transpose(p1["wd"], (1, 2, 0)).astype(jnp.float32)               # (3,3,Cin)
    wdb = jnp.transpose(p2["wd"], (1, 2, 0)).astype(jnp.float32)               # (3,3,Cm)
    # branch1 final 1x1 (dw-BN + pw-BN folded)
    w2t_a = jnp.transpose(p1["w2"])                                            # (Cin, c)
    wa = p1["s1"][:, None] * w2t_a * p1["s2"][None, :]
    ba = (p1["b1"] @ w2t_a) * p1["s2"] + p1["b2"]
    # branch2 final 1x1 (dw-BN + pw-BN folded)
    w3t_b = jnp.transpose(p2["w3"])                                            # (Cm, c)
    wb = p2["s2"][:, None] * w3t_b * p2["s3"][None, :]
    bb = (p2["b2"] @ w3t_b) * p2["s3"] + p2["b3"]
    # Fold concat + channel_shuffle(groups=2) into the weight column order:
    # output channel 2i <- branch1 channel i, 2i+1 <- branch2 channel i.
    wa_i = jnp.stack([wa, jnp.zeros_like(wa)], axis=-1).reshape(Cin, 2 * c)
    wb_i = jnp.stack([jnp.zeros_like(wb), wb], axis=-1).reshape(Cm, 2 * c)
    wa_i = wa_i.astype(jnp.bfloat16)
    wb_i = wb_i.astype(jnp.bfloat16)
    bo = jnp.stack([ba, bb], axis=-1).reshape(1, 2 * c).astype(jnp.float32)

    flops = N * (2 * HW * Cin * Cm + 18 * Hz * Wz * (Cin + Cm)
                 + 2 * Hz * Wz * (Cin + Cm) * 2 * c)
    bytes_accessed = (4 * (x2d.size + N * 2 * c * Hz * Wz + wda.size + wdb.size
                           + b1.size + bo.size)
                      + 2 * (w1.size + wa_i.size + wb_i.size))

    return pl.pallas_call(
        functools.partial(_unit2_kernel, H=H, W=W, stride=stride),
        out_shape=jax.ShapeDtypeStruct((N, 2 * c, Hz * Wz), jnp.float32),
        grid=(N,),
        in_specs=[
            pl.BlockSpec((1, Cin, HW), lambda n: (n, 0, 0)),
            pl.BlockSpec((Cin, Cm), lambda n: (0, 0)),
            pl.BlockSpec((1, Cm), lambda n: (0, 0)),
            pl.BlockSpec((3, 3, Cin), lambda n: (0, 0, 0)),
            pl.BlockSpec((3, 3, Cm), lambda n: (0, 0, 0)),
            pl.BlockSpec((Cin, 2 * c), lambda n: (0, 0)),
            pl.BlockSpec((Cm, 2 * c), lambda n: (0, 0)),
            pl.BlockSpec((1, 2 * c), lambda n: (0, 0)),
        ],
        out_specs=pl.BlockSpec((1, 2 * c, Hz * Wz), lambda n: (n, 0, 0)),
        scratch_shapes=[pltpu.VMEM((Hp, Wp, Cin), jnp.float32),
                        pltpu.VMEM((Hp, Wp, Cm), jnp.float32)],
        compiler_params=_compiler_params(),
        cost_estimate=pl.CostEstimate(flops=flops, transcendentals=0,
                                      bytes_accessed=bytes_accessed),
    )(x2d, w1, b1, wda, wdb, wa_i, wb_i, bo)


# ----------------------------------------------------------------------------
# Module forward (kernel + free reshapes only — no wrapper HBM passes)
# ----------------------------------------------------------------------------
def inverted_residual_forward(x_nchw, params, benchmodel, stride):
    assert stride in (1, 2)
    N, Cin, H, W = x_nchw.shape
    x2d = x_nchw.reshape(N, Cin, H * W).astype(jnp.float32)     # free, contiguous
    if benchmodel == 1:
        assert stride == 1, "benchmodel=1 requires stride=1 (ShuffleNetV2 basic unit)"
        c = Cin // 2
        out = _unit1_call(x2d, params["banch2"], H, W)          # (N, c, 2*H*W)
        return out.reshape(N, 2 * c, H, W)                      # == concat + shuffle
    out = _unit2_call(x2d, params["banch1"], params["banch2"], H, W, stride)
    Hz, Wz = _out_hw(H, W, stride)
    return out.reshape(N, out.shape[1], Hz, Wz)


# ----------------------------------------------------------------------------
# Deterministic parameter init (PyTorch shapes; BN folded to scale/shift)
# ----------------------------------------------------------------------------
EPS = 1e-5


def _fold_bn(gamma, beta, mean, var):
    scale = gamma / jnp.sqrt(var + EPS)
    shift = beta - mean * scale
    return scale, shift


def _bn_params(key, c):
    k1, k2, k3, k4 = jax.random.split(key, 4)
    gamma = jax.random.uniform(k1, (c,), jnp.float32, 0.5, 1.5)
    beta = 0.1 * jax.random.normal(k2, (c,), jnp.float32)
    mean = 0.1 * jax.random.normal(k3, (c,), jnp.float32)
    var = jax.random.uniform(k4, (c,), jnp.float32, 0.5, 1.5)
    return _fold_bn(gamma, beta, mean, var)


def init_params(key, inp, oup, benchmodel):
    oup_inc = oup // 2
    keys = jax.random.split(key, 16)
    cin2 = oup_inc if benchmodel == 1 else inp

    s1, b1 = _bn_params(keys[3], oup_inc)
    s2, b2 = _bn_params(keys[4], oup_inc)
    s3, b3 = _bn_params(keys[5], oup_inc)
    banch2 = dict(
        w1=0.3 * jax.random.normal(keys[0], (oup_inc, cin2), jnp.float32),
        wd=0.3 * jax.random.normal(keys[1], (oup_inc, 3, 3), jnp.float32),
        w3=0.3 * jax.random.normal(keys[2], (oup_inc, oup_inc), jnp.float32),
        s1=s1, b1=b1, s2=s2, b2=b2, s3=s3, b3=b3)

    params = {"banch2": banch2}
    if benchmodel != 1:
        sa, ba = _bn_params(keys[8], inp)
        sb, bb = _bn_params(keys[9], oup_inc)
        params["banch1"] = dict(
            wd=0.3 * jax.random.normal(keys[6], (inp, 3, 3), jnp.float32),
            w2=0.3 * jax.random.normal(keys[7], (oup_inc, inp), jnp.float32),
            s1=sa, b1=ba, s2=sb, b2=bb)
    return params


# ----------------------------------------------------------------------------
# Pure-JAX (lax.conv) reference for correctness checking
# ----------------------------------------------------------------------------
def channel_shuffle(x_nchw, groups):
    n, c, h, w = x_nchw.shape
    x = x_nchw.reshape(n, groups, c // groups, h, w)
    x = jnp.transpose(x, (0, 2, 1, 3, 4))
    return x.reshape(n, c, h, w)


def _conv1x1_ref(x, w):
    return lax.conv_general_dilated(x, w[:, :, None, None], (1, 1), "VALID",
                                    dimension_numbers=("NCHW", "OIHW", "NCHW"))


def _dw3x3_ref(x, w, stride):
    c = x.shape[1]
    return lax.conv_general_dilated(x, w[:, None, :, :], (stride, stride),
                                    [(1, 1), (1, 1)],
                                    dimension_numbers=("NCHW", "OIHW", "NCHW"),
                                    feature_group_count=c)


def _bn_ref(x, s, b):
    return x * s[None, :, None, None] + b[None, :, None, None]


def _ref_branch2(x, p, stride):
    y = jnp.maximum(_bn_ref(_conv1x1_ref(x, p["w1"]), p["s1"], p["b1"]), 0.0)
    z = _bn_ref(_dw3x3_ref(y, p["wd"], stride), p["s2"], p["b2"])
    return jnp.maximum(_bn_ref(_conv1x1_ref(z, p["w3"]), p["s3"], p["b3"]), 0.0)


def _ref_branch1(x, p, stride):
    z = _bn_ref(_dw3x3_ref(x, p["wd"], stride), p["s1"], p["b1"])
    return jnp.maximum(_bn_ref(_conv1x1_ref(z, p["w2"]), p["s2"], p["b2"]), 0.0)


def ref_forward(x, params, benchmodel, stride):
    if benchmodel == 1:
        c = x.shape[1] // 2
        out = jnp.concatenate(
            [x[:, :c], _ref_branch2(x[:, c:], params["banch2"], stride)], axis=1)
    else:
        out = jnp.concatenate(
            [_ref_branch1(x, params["banch1"], stride),
             _ref_branch2(x, params["banch2"], stride)], axis=1)
    return channel_shuffle(out, 2)


# ----------------------------------------------------------------------------
if __name__ == "__main__":
    key = jax.random.PRNGKey(0)
    kx, kp1, kp2 = jax.random.split(key, 3)

    x = jax.random.normal(kx, (2, 4, 16, 16), jnp.float32)   # NCHW, like PyTorch
    fwd = jax.jit(inverted_residual_forward, static_argnums=(2, 3))

    # Config A: benchmodel=1 (basic unit), stride=1, inp=oup=4
    params1 = init_params(kp1, inp=4, oup=4, benchmodel=1)
    out1 = jax.block_until_ready(fwd(x, params1, 1, 1))
    ref1 = ref_forward(x, params1, 1, 1)
    assert out1.shape == (2, 4, 16, 16)
    # bf16 MXU operands -> slightly loosened tolerance vs the f32 lax.conv reference
    assert jnp.allclose(out1, ref1, rtol=5e-2, atol=3e-2), "benchmodel=1 mismatch"

    # Config B: benchmodel=2 (downsample unit), stride=2, inp=4, oup=8
    params2 = init_params(kp2, inp=4, oup=8, benchmodel=2)
    out2 = jax.block_until_ready(fwd(x, params2, 2, 2))
    ref2 = ref_forward(x, params2, 2, 2)
    assert out2.shape == (2, 8, 8, 8)
    assert jnp.allclose(out2, ref2, rtol=5e-2, atol=3e-2), "benchmodel=2 mismatch"

    print("KERNEL_OK")
</pallas_src>

<mosaic_0001>
module attributes {stable_mosaic.version = 11 : i64} {
  func.func @_unit1_kernel(%arg0: i32, %arg1: memref<1x4x256xf32, #tpu.memory_space<vmem>>, %arg2: memref<2x2xbf16, #tpu.memory_space<vmem>>, %arg3: memref<1x2xf32, #tpu.memory_space<vmem>>, %arg4: memref<3x3x2xf32, #tpu.memory_space<vmem>>, %arg5: memref<2x2xbf16, #tpu.memory_space<vmem>>, %arg6: memref<1x2xf32, #tpu.memory_space<vmem>>, %arg7: memref<1x2x512xf32, #tpu.memory_space<vmem>>, %arg8: memref<18x26x2xf32, #tpu.memory_space<vmem>>) attributes {dimension_semantics = [#tpu.dimension_semantics<parallel>], iteration_bounds = array<i64: 2>, scalar_prefetch = 0 : i64, scratch_operands = 1 : i64, tpu.core_type = #tpu.core_type<tc>, window_params = [{transform_indices = @transform_0, window_bounds = array<i64: 1, 4, 256>}, {pipeline_mode = #tpu.pipeline_mode<synchronous>, transform_indices = @transform_1, window_bounds = array<i64: 2, 2>}, {pipeline_mode = #tpu.pipeline_mode<synchronous>, transform_indices = @transform_2, window_bounds = array<i64: 1, 2>}, {pipeline_mode = #tpu.pipeline_mode<synchronous>, transform_indices = @transform_3, window_bounds = array<i64: 3, 3, 2>}, {pipeline_mode = #tpu.pipeline_mode<synchronous>, transform_indices = @transform_4, window_bounds = array<i64: 2, 2>}, {pipeline_mode = #tpu.pipeline_mode<synchronous>, transform_indices = @transform_5, window_bounds = array<i64: 1, 2>}, {transform_indices = @transform_6, window_bounds = array<i64: 1, 2, 512>}]} {
    %cst = arith.constant 0.000000e+00 : f32
    %0 = vector.broadcast %cst : f32 to vector<1x26x2xf32>
    %c0 = arith.constant 0 : index
    %c0_0 = arith.constant 0 : index
    %c0_1 = arith.constant 0 : index
    %1 = vector.load %arg8[%c0, %c0_0, %c0_1] : memref<18x26x2xf32, #tpu.memory_space<vmem>>, vector<1x26x2xf32>
    tpu.vector_store %arg8[%c0, %c0_0, %c0_1], %0 {strides = array<i32>} : memref<18x26x2xf32, #tpu.memory_space<vmem>>, vector<1x26x2xf32>,
    %cst_2 = arith.constant 0.000000e+00 : f32
    %2 = vector.broadcast %cst_2 : f32 to vector<1x26x2xf32>
    %c17 = arith.constant 17 : index
    %c0_3 = arith.constant 0 : index
    %c0_4 = arith.constant 0 : index
    %3 = vector.load %arg8[%c17, %c0_3, %c0_4] : memref<18x26x2xf32, #tpu.memory_space<vmem>>, vector<1x26x2xf32>
    tpu.vector_store %arg8[%c17, %c0_3, %c0_4], %2 {strides = array<i32>} : memref<18x26x2xf32, #tpu.memory_space<vmem>>, vector<1x26x2xf32>,
    %cst_5 = arith.constant 0.000000e+00 : f32
    %4 = vector.broadcast %cst_5 : f32 to vector<18x8x2xf32>
    %c0_6 = arith.constant 0 : index
    %c0_7 = arith.constant 0 : index
    %c0_8 = arith.constant 0 : index
    %5 = vector.load %arg8[%c0_6, %c0_7, %c0_8] : memref<18x26x2xf32, #tpu.memory_space<vmem>>, vector<18x8x2xf32>
    tpu.vector_store %arg8[%c0_6, %c0_7, %c0_8], %4 {strides = array<i32>} : memref<18x26x2xf32, #tpu.memory_space<vmem>>, vector<18x8x2xf32>,
    %cst_9 = arith.constant 0.000000e+00 : f32
    %6 = vector.broadcast %cst_9 : f32 to vector<18x2x2xf32>
    %c0_10 = arith.constant 0 : index
    %c24 = arith.constant 24 : index
    %c0_11 = arith.constant 0 : index
    %7 = vector.load %arg8[%c0_10, %c24, %c0_11] : memref<18x26x2xf32, #tpu.memory_space<vmem>>, vector<18x2x2xf32>
    tpu.vector_store %arg8[%c0_10, %c24, %c0_11], %6 {strides = array<i32>} : memref<18x26x2xf32, #tpu.memory_space<vmem>>, vector<18x2x2xf32>,
    %c0_12 = arith.constant 0 : index
    %c0_13 = arith.constant 0 : index
    %c0_14 = arith.constant 0 : index
    %8 = vector.load %arg1[%c0_12, %c0_13, %c0_14] : memref<1x4x256xf32, #tpu.memory_space<vmem>>, vector<1x2x256xf32>
    %9 = vector.shape_cast %8 : vector<1x2x256xf32> to vector<2x256xf32>
    %c0_15 = arith.constant 0 : index
    %c2 = arith.constant 2 : index
    %c0_16 = arith.constant 0 : index
    %10 = vector.load %arg1[%c0_15, %c2, %c0_16] : memref<1x4x256xf32, #tpu.memory_space<vmem>>, vector<1x2x256xf32>
    %11 = vector.shape_cast %10 : vector<1x2x256xf32> to vector<2x256xf32>
    %12 = tpu.transpose %11, [1, 0] : vector<2x256xf32> -> vector<256x2xf32>
    %13 = arith.truncf %12 : vector<256x2xf32> to vector<256x2xbf16>
    %c0_17 = arith.constant 0 : index
    %c0_18 = arith.constant 0 : index
    %14 = vector.load %arg2[%c0_17, %c0_18] : memref<2x2xbf16, #tpu.memory_space<vmem>>, vector<2x2xbf16>
    %cst_19 = arith.constant dense<0.000000e+00> : vector<256x2xf32>
    %15 = tpu.matmul %13, %14, %cst_19 {dimension_numbers = #tpu.dot_dimension_numbers<[1], [0], [0], [1], [0, 0, 1, 1], [], []>} : vector<256x2xbf16>, vector<2x2xbf16>, vector<256x2xf32> -> vector<256x2xf32>
    %c0_20 = arith.constant 0 : index
    %c0_21 = arith.constant 0 : index
    %16 = vector.load %arg3[%c0_20, %c0_21] : memref<1x2xf32, #tpu.memory_space<vmem>>, vector<1x2xf32>
    %17 = vector.broadcast %16 : vector<1x2xf32> to vector<256x2xf32>
    %18 = arith.addf %15, %17 : vector<256x2xf32>
    %cst_22 = arith.constant 0.000000e+00 : f32
    %19 = vector.broadcast %cst_22 : f32 to vector<256x2xf32>
    %20 = arith.maximumf %18, %19 : vector<256x2xf32>
    %21 = vector.shape_cast %20 : vector<256x2xf32> to vector<16x16x2xf32>
    %c1 = arith.constant 1 : index
    %c8 = arith.constant 8 : index
    %c0_23 = arith.constant 0 : index
    %22 = vector.load %arg8[%c1, %c8, %c0_23] : memref<18x26x2xf32, #tpu.memory_space<vmem>>, vector<16x16x2xf32>
    tpu.vector_store %arg8[%c1, %c8, %c0_23], %21 {strides = array<i32>} : memref<18x26x2xf32, #tpu.memory_space<vmem>>, vector<16x16x2xf32>,
    %c0_24 = arith.constant 0 : index
    %c0_25 = arith.constant 0 : index
    %c0_26 = arith.constant 0 : index
    %23 = vector.load %arg4[%c0_24, %c0_25, %c0_26] : memref<3x3x2xf32, #tpu.memory_space<vmem>>, vector<3x3x2xf32>
    %cst_27 = arith.constant 0.000000e+00 : f32
    %24 = vector.broadcast %cst_27 : f32 to vector<16x16x2xf32>
    %c0_28 = arith.constant 0 : index
    %c7 = arith.constant 7 : index
    %c0_29 = arith.constant 0 : index
    %25 = vector.load %arg8[%c0_28, %c7, %c0_29] : memref<18x26x2xf32, #tpu.memory_space<vmem>>, vector<16x16x2xf32>
    %26 = vector.extract_strided_slice %23 {offsets = [0, 0, 0], sizes = [1, 1, 2], strides = [1, 1, 1]} : vector<3x3x2xf32> to vector<1x1x2xf32>
    %27 = vector.shape_cast %26 : vector<1x1x2xf32> to vector<2xf32>
    %28 = vector.shape_cast %27 : vector<2xf32> to vector<1x1x2xf32>
    %29 = vector.broadcast %28 : vector<1x1x2xf32> to vector<16x16x2xf32>
    %30 = arith.mulf %25, %29 : vector<16x16x2xf32>
    %31 = arith.addf %24, %30 : vector<16x16x2xf32>
    %c0_30 = arith.constant 0 : index
    %c8_31 = arith.constant 8 : index
    %c0_32 = arith.constant 0 : index
    %32 = vector.load %arg8[%c0_30, %c8_31, %c0_32] : memref<18x26x2xf32, #tpu.memory_space<vmem>>, vector<16x16x2xf32>
    %33 = vector.extract_strided_slice %23 {offsets = [0, 1, 0], sizes = [1, 1, 2], strides = [1, 1, 1]} : vector<3x3x2xf32> to vector<1x1x2xf32>
    %34 = vector.shape_cast %33 : vector<1x1x2xf32> to vector<2xf32>
    %35 = vector.shape_cast %34 : vector<2xf32> to vector<1x1x2xf32>
    %36 = vector.broadcast %35 : vector<1x1x2xf32> to vector<16x16x2xf32>
    %37 = arith.mulf %32, %36 : vector<16x16x2xf32>
    %38 = arith.addf %31, %37 : vector<16x16x2xf32>
    %c0_33 = arith.constant 0 : index
    %c9 = arith.constant 9 : index
    %c0_34 = arith.constant 0 : index
    %39 = vector.load %arg8[%c0_33, %c9, %c0_34] : memref<18x26x2xf32, #tpu.memory_space<vmem>>, vector<16x16x2xf32>
    %40 = vector.extract_strided_slice %23 {offsets = [0, 2, 0], sizes = [1, 1, 2], strides = [1, 1, 1]} : vector<3x3x2xf32> to vector<1x1x2xf32>
    %41 = vector.shape_cast %40 : vector<1x1x2xf32> to vector<2xf32>
    %42 = vector.shape_cast %41 : vector<2xf32> to vector<1x1x2xf32>
    %43 = vector.broadcast %42 : vector<1x1x2xf32> to vector<16x16x2xf32>
    %44 = arith.mulf %39, %43 : vector<16x16x2xf32>
    %45 = arith.addf %38, %44 : vector<16x16x2xf32>
    %c1_35 = arith.constant 1 : index
    %c7_36 = arith.constant 7 : index
    %c0_37 = arith.constant 0 : index
    %46 = vector.load %arg8[%c1_35, %c7_36, %c0_37] : memref<18x26x2xf32, #tpu.memory_space<vmem>>, vector<16x16x2xf32>
    %47 = vector.extract_strided_slice %23 {offsets = [1, 0, 0], sizes = [1, 1, 2], strides = [1, 1, 1]} : vector<3x3x2xf32> to vector<1x1x2xf32>
    %48 = vector.shape_cast %47 : vector<1x1x2xf32> to vector<2xf32>
    %49 = vector.shape_cast %48 : vector<2xf32> to vector<1x1x2xf32>
    %50 = vector.broadcast %49 : vector<1x1x2xf32> to vector<16x16x2xf32>
    %51 = arith.mulf %46, %50 : vector<16x16x2xf32>
    %52 = arith.addf %45, %51 : vector<16x16x2xf32>
    %c1_38 = arith.constant 1 : index
    %c8_39 = arith.constant 8 : index
    %c0_40 = arith.constant 0 : index
    %53 = vector.load %arg8[%c1_38, %c8_39, %c0_40] : memref<18x26x2xf32, #tpu.memory_space<vmem>>, vector<16x16x2xf32>
    %54 = vector.extract_strided_slice %23 {offsets = [1, 1, 0], sizes = [1, 1, 2], strides = [1, 1, 1]} : vector<3x3x2xf32> to vector<1x1x2xf32>
    %55 = vector.shape_cast %54 : vector<1x1x2xf32> to vector<2xf32>
    %56 = vector.shape_cast %55 : vector<2xf32> to vector<1x1x2xf32>
    %57 = vector.broadcast %56 : vector<1x1x2xf32> to vector<16x16x2xf32>
    %58 = arith.mulf %53, %57 : vector<16x16x2xf32>
    %59 = arith.addf %52, %58 : vector<16x16x2xf32>
    %c1_41 = arith.constant 1 : index
    %c9_42 = arith.constant 9 : index
    %c0_43 = arith.constant 0 : index
    %60 = vector.load %arg8[%c1_41, %c9_42, %c0_43] : memref<18x26x2xf32, #tpu.memory_space<vmem>>, vector<16x16x2xf32>
    %61 = vector.extract_strided_slice %23 {offsets = [1, 2, 0], sizes = [1, 1, 2], strides = [1, 1, 1]} : vector<3x3x2xf32> to vector<1x1x2xf32>
    %62 = vector.shape_cast %61 : vector<1x1x2xf32> to vector<2xf32>
    %63 = vector.shape_cast %62 : vector<2xf32> to vector<1x1x2xf32>
    %64 = vector.broadcast %63 : vector<1x1x2xf32> to vector<16x16x2xf32>
    %65 = arith.mulf %60, %64 : vector<16x16x2xf32>
    %66 = arith.addf %59, %65 : vector<16x16x2xf32>
    %c2_44 = arith.constant 2 : index
    %c7_45 = arith.constant 7 : index
    %c0_46 = arith.constant 0 : index
    %67 = vector.load %arg8[%c2_44, %c7_45, %c0_46] : memref<18x26x2xf32, #tpu.memory_space<vmem>>, vector<16x16x2xf32>
    %68 = vector.extract_strided_slice %23 {offsets = [2, 0, 0], sizes = [1, 1, 2], strides = [1, 1, 1]} : vector<3x3x2xf32> to vector<1x1x2xf32>
    %69 = vector.shape_cast %68 : vector<1x1x2xf32> to vector<2xf32>
    %70 = vector.shape_cast %69 : vector<2xf32> to vector<1x1x2xf32>
    %71 = vector.broadcast %70 : vector<1x1x2xf32> to vector<16x16x2xf32>
    %72 = arith.mulf %67, %71 : vector<16x16x2xf32>
    %73 = arith.addf %66, %72 : vector<16x16x2xf32>
    %c2_47 = arith.constant 2 : index
    %c8_48 = arith.constant 8 : index
    %c0_49 = arith.constant 0 : index
    %74 = vector.load %arg8[%c2_47, %c8_48, %c0_49] : memref<18x26x2xf32, #tpu.memory_space<vmem>>, vector<16x16x2xf32>
    %75 = vector.extract_strided_slice %23 {offsets = [2, 1, 0], sizes = [1, 1, 2], strides = [1, 1, 1]} : vector<3x3x2xf32> to vector<1x1x2xf32>
    %76 = vector.shape_cast %75 : vector<1x1x2xf32> to vector<2xf32>
    %77 = vector.shape_cast %76 : vector<2xf32> to vector<1x1x2xf32>
    %78 = vector.broadcast %77 : vector<1x1x2xf32> to vector<16x16x2xf32>
    %79 = arith.mulf %74, %78 : vector<16x16x2xf32>
    %80 = arith.addf %73, %79 : vector<16x16x2xf32>
    %c2_50 = arith.constant 2 : index
    %c9_51 = arith.constant 9 : index
    %c0_52 = arith.constant 0 : index
    %81 = vector.load %arg8[%c2_50, %c9_51, %c0_52] : memref<18x26x2xf32, #tpu.memory_space<vmem>>, vector<16x16x2xf32>
    %82 = vector.extract_strided_slice %23 {offsets = [2, 2, 0], sizes = [1, 1, 2], strides = [1, 1, 1]} : vector<3x3x2xf32> to vector<1x1x2xf32>
    %83 = vector.shape_cast %82 : vector<1x1x2xf32> to vector<2xf32>
    %84 = vector.shape_cast %83 : vector<2xf32> to vector<1x1x2xf32>
    %85 = vector.broadcast %84 : vector<1x1x2xf32> to vector<16x16x2xf32>
    %86 = arith.mulf %81, %85 : vector<16x16x2xf32>
    %87 = arith.addf %80, %86 : vector<16x16x2xf32>
    %88 = vector.shape_cast %87 : vector<16x16x2xf32> to vector<256x2xf32>
    %89 = arith.truncf %88 : vector<256x2xf32> to vector<256x2xbf16>
    %c0_53 = arith.constant 0 : index
    %c0_54 = arith.constant 0 : index
    %90 = vector.load %arg5[%c0_53, %c0_54] : memref<2x2xbf16, #tpu.memory_space<vmem>>, vector<2x2xbf16>
    %cst_55 = arith.constant dense<0.000000e+00> : vector<256x2xf32>
    %91 = tpu.matmul %89, %90, %cst_55 {dimension_numbers = #tpu.dot_dimension_numbers<[1], [0], [0], [1], [0, 0, 1, 1], [], []>} : vector<256x2xbf16>, vector<2x2xbf16>, vector<256x2xf32> -> vector<256x2xf32>
    %c0_56 = arith.constant 0 : index
    %c0_57 = arith.constant 0 : index
    %92 = vector.load %arg6[%c0_56, %c0_57] : memref<1x2xf32, #tpu.memory_space<vmem>>, vector<1x2xf32>
    %93 = vector.broadcast %92 : vector<1x2xf32> to vector<256x2xf32>
    %94 = arith.addf %91, %93 : vector<256x2xf32>
    %cst_58 = arith.constant 0.000000e+00 : f32
    %95 = vector.broadcast %cst_58 : f32 to vector<256x2xf32>
    %96 = arith.maximumf %94, %95 : vector<256x2xf32>
    %c0_59 = arith.constant 0 : index
    %c0_60 = arith.constant 0 : index
    %c0_61 = arith.constant 0 : index
    %97 = vector.load %arg7[%c0_59, %c0_60, %c0_61] : memref<1x2x512xf32, #tpu.memory_space<vmem>>, vector<1x2x256xf32>
    %98 = vector.shape_cast %97 : vector<1x2x256xf32> to vector<2x256xf32>
    %99 = vector.shape_cast %9 : vector<2x256xf32> to vector<1x2x256xf32>
    tpu.vector_store %arg7[%c0_59, %c0_60, %c0_61], %99 {strides = array<i32>} : memref<1x2x512xf32, #tpu.memory_space<vmem>>, vector<1x2x256xf32>,
    %100 = tpu.transpose %96, [1, 0] : vector<256x2xf32> -> vector<2x256xf32>
    %c0_62 = arith.constant 0 : index
    %c0_63 = arith.constant 0 : index
    %c256 = arith.constant 256 : index
    %101 = vector.load %arg7[%c0_62, %c0_63, %c256] : memref<1x2x512xf32, #tpu.memory_space<vmem>>, vector<1x2x256xf32>
    %102 = vector.shape_cast %101 : vector<1x2x256xf32> to vector<2x256xf32>
    %103 = vector.shape_cast %100 : vector<2x256xf32> to vector<1x2x256xf32>
    tpu.vector_store %arg7[%c0_62, %c0_63, %c256], %103 {strides = array<i32>} : memref<1x2x512xf32, #tpu.memory_space<vmem>>, vector<1x2x256xf32>,
    return
  }
  func.func @transform_0(%arg0: i32) -> (i32, i32, i32) {
    %c0_i32 = arith.constant 0 : i32
    %c0_i32_0 = arith.constant 0 : i32
    %c0_i32_1 = arith.constant 0 : i32
    return %arg0, %c0_i32, %c0_i32_0 : i32, i32, i32
  }
  func.func @transform_1(%arg0: i32) -> (i32, i32) {
    %c0_i32 = arith.constant 0 : i32
    %c0_i32_0 = arith.constant 0 : i32
    %c0_i32_1 = arith.constant 0 : i32
    return %c0_i32, %c0_i32_0 : i32, i32
  }
  func.func @transform_2(%arg0: i32) -> (i32, i32) {
    %c0_i32 = arith.constant 0 : i32
    %c0_i32_0 = arith.constant 0 : i32
    %c0_i32_1 = arith.constant 0 : i32
    return %c0_i32, %c0_i32_0 : i32, i32
  }
  func.func @transform_3(%arg0: i32) -> (i32, i32, i32) {
    %c0_i32 = arith.constant 0 : i32
    %c0_i32_0 = arith.constant 0 : i32
    %c0_i32_1 = arith.constant 0 : i32
    %c0_i32_2 = arith.constant 0 : i32
    return %c0_i32, %c0_i32_0, %c0_i32_1 : i32, i32, i32
  }
  func.func @transform_4(%arg0: i32) -> (i32, i32) {
    %c0_i32 = arith.constant 0 : i32
    %c0_i32_0 = arith.constant 0 : i32
    %c0_i32_1 = arith.constant 0 : i32
    return %c0_i32, %c0_i32_0 : i32, i32
  }
  func.func @transform_5(%arg0: i32) -> (i32, i32) {
    %c0_i32 = arith.constant 0 : i32
    %c0_i32_0 = arith.constant 0 : i32
    %c0_i32_1 = arith.constant 0 : i32
    return %c0_i32, %c0_i32_0 : i32, i32
  }
  func.func @transform_6(%arg0: i32) -> (i32, i32, i32) {
    %c0_i32 = arith.constant 0 : i32
    %c0_i32_0 = arith.constant 0 : i32
    %c0_i32_1 = arith.constant 0 : i32
    return %arg0, %c0_i32, %c0_i32_0 : i32, i32, i32
  }
}

</mosaic_0001>

<llo_original>
// kernel: inverted_residual_forward.1
$region0: #{inverted_residual_forward.1}
  #allocation0 [shape = 'u32[]', space=smem, size = 0x4, offset = 0x4, fixed_abs, tag = 'smem constant byte address 0x4 - core index']
  #allocation1 [shape = 'u32[144,128]{1,0:T(1,128)}', space=vmem, size = 0x12000, scoped, tag = 'internal scratch']
  #allocation2 [shape = 'f32[18,26,2]{2,1,0:T(8,128)}', space=vmem, size = 0x48000, scoped, tag = 'scratch operand']
  %s0 = inlined_call_operand.vmem [shape: f32[2,4,256], index: 0, kind: input, shape index: {}]
  %s1 = inlined_call_operand.vmem [shape: bf16[2,2], index: 1, kind: input, shape index: {}]
  %s2 = inlined_call_operand.vmem [shape: f32[1,2], index: 2, kind: input, shape index: {}]
  %s3 = inlined_call_operand.vmem [shape: f32[3,3,2], index: 3, kind: input, shape index: {}]
  %s4 = inlined_call_operand.vmem [shape: bf16[2,2], index: 4, kind: input, shape index: {}]
  %s5 = inlined_call_operand.vmem [shape: f32[1,2], index: 5, kind: input, shape index: {}]
  %s6 = inlined_call_operand.vmem [shape: f32[2,2,512], index: 6, kind: output, shape index: {}]
  %s7 = sld [smem:[#allocation0]]
  $region57: #{inverted_residual_forward.1} parent=0
    _
  %s9 = ssub.s32 1, %s7
  %s10 = scalar_select 0, %s9, %s7
  loop: start=0, step=1, limit=4
  $region2: #{inverted_residual_forward.1} parent=0 // loop_pre_header
    _
  $region3: #{inverted_residual_forward.1} parent=0 // loop_header
    %s12 = sphi 0, %s16
    %p13 = scmp.ge.s32.totalorder %s12, 4
    %s22 = sphi 0, %s24
    %s25 = sphi 0, %s22
    %s26 = sphi 0, %s25
    %s42 = sphi 0, %s26
    %s46 = sphi 0, %s46
    %s48 = sphi 0, %s46
    %s49 = sphi 0, %s48
    %s63 = sphi 0, %s49
    %s67 = sphi 0, %s67
    %s69 = sphi 0, %s67
    %s70 = sphi 0, %s69
    %s84 = sphi 0, %s70
    %s88 = sphi 0, %s88
    %s90 = sphi 0, %s88
    %s91 = sphi 0, %s90
    %s105 = sphi 0, %s91
    %s109 = sphi 0, %s109
    %s111 = sphi 0, %s109
    %s112 = sphi 0, %s111
    %s126 = sphi 0, %s112
    %s130 = sphi 0, %s130
    %s132 = sphi 0, %s130
    %s133 = sphi 0, %s132
    %s147 = sphi 0, %s133
    %s153 = sphi 0, %s155
    %s156 = sphi 0, %s153
    %s157 = sphi 0, %s156
    %s173 = sphi 0, %s157
  $region4: #{inverted_residual_forward.1} parent=0 // loop_header_branch
    %15 = sbr.rel (%p13) target = $region8
  $region5: #{inverted_residual_forward.1} parent=0 // loop_body
    %s17 = ssub.s32 %s12, 1
    %s18 = ssub.s32 %s12, 2
    %s19 = sadd.s32 %s12, 1
    %s20 = ssub.s32 %s12, %s19
    %p21 = scmp.eq.s32.totalorder %s20, 0
    %s23 = sadd.s32 %s22, 1
    %s24 = scalar_select %p21, %s22, %s23
    %p27 = pneg %p21
    %p28 = scmp.eq.s32.totalorder %s12, 1
    %p29 = por %p27, %p28
    %p30 = scmp.ne.s32.totalorder %s22, %s25
    %p31 = scmp.eq.s32.totalorder %s12, 0
    %p32 = por %p30, %p31
    %p33 = scmp.ne.s32.totalorder %s22, %s25
    %p34 = scmp.eq.s32.totalorder %s17, 1
    %p35 = por %p33, %p34
    %p36 = scmp.ne.s32.totalorder %s25, %s26
    %p37 = scmp.eq.s32.totalorder %s17, 0
    %p38 = por %p36, %p37
    %p39 = scmp.ne.s32.totalorder %s25, %s26
    %p40 = scmp.eq.s32.totalorder %s18, 1
    %p41 = por %p39, %p40
    %p43 = scmp.ne.s32.totalorder %s26, %s42
    %p44 = scmp.eq.s32.totalorder %s18, 0
    %p45 = por %p43, %p44
    %s47 = sadd.s32 %s46, 1
    %p50 = scmp.eq.s32.totalorder %s12, 1
    %p51 = scmp.ne.s32.totalorder %s46, %s48
    %p52 = scmp.eq.s32.totalorder %s12, 0
    %p53 = por %p51, %p52
    %p54 = scmp.ne.s32.totalorder %s46, %s48
    %p55 = scmp.eq.s32.totalorder %s17, 1
    %p56 = por %p54, %p55
    %p57 = scmp.ne.s32.totalorder %s48, %s49
    %p58 = scmp.eq.s32.totalorder %s17, 0
    %p59 = por %p57, %p58
    %p60 = scmp.ne.s32.totalorder %s48, %s49
    %p61 = scmp.eq.s32.totalorder %s18, 1
    %p62 = por %p60, %p61
    %p64 = scmp.ne.s32.totalorder %s49, %s63
    %p65 = scmp.eq.s32.totalorder %s18, 0
    %p66 = por %p64, %p65
    %s68 = sadd.s32 %s67, 1
    %p71 = scmp.eq.s32.totalorder %s12, 1
    %p72 = scmp.ne.s32.totalorder %s67, %s69
    %p73 = scmp.eq.s32.totalorder %s12, 0
    %p74 = por %p72, %p73
    %p75 = scmp.ne.s32.totalorder %s67, %s69
    %p76 = scmp.eq.s32.totalorder %s17, 1
    %p77 = por %p75, %p76
    %p78 = scmp.ne.s32.totalorder %s69, %s70
    %p79 = scmp.eq.s32.totalorder %s17, 0
    %p80 = por %p78, %p79
    %p81 = scmp.ne.s32.totalorder %s69, %s70
    %p82 = scmp.eq.s32.totalorder %s18, 1
    %p83 = por %p81, %p82
    %p85 = scmp.ne.s32.totalorder %s70, %s84
    %p86 = scmp.eq.s32.totalorder %s18, 0
    %p87 = por %p85, %p86
    %s89 = sadd.s32 %s88, 1
    %p92 = scmp.eq.s32.totalorder %s12, 1
    %p93 = scmp.ne.s32.totalorder %s88, %s90
    %p94 = scmp.eq.s32.totalorder %s12, 0
    %p95 = por %p93, %p94
    %p96 = scmp.ne.s32.totalorder %s88, %s90
    %p97 = scmp.eq.s32.totalorder %s17, 1
    %p98 = por %p96, %p97
    %p99 = scmp.ne.s32.totalorder %s90, %s91
    %p100 = scmp.eq.s32.totalorder %s17, 0
    %p101 = por %p99, %p100
    %p102 = scmp.ne.s32.totalorder %s90, %s91
    %p103 = scmp.eq.s32.totalorder %s18, 1
    %p104 = por %p102, %p103
    %p106 = scmp.ne.s32.totalorder %s91, %s105
    %p107 = scmp.eq.s32.totalorder %s18, 0
    %p108 = por %p106, %p107
    %s110 = sadd.s32 %s109, 1
    %p113 = scmp.eq.s32.totalorder %s12, 1
    %p114 = scmp.ne.s32.totalorder %s109, %s111
    %p115 = scmp.eq.s32.totalorder %s12, 0
    %p116 = por %p114, %p115
    %p117 = scmp.ne.s32.totalorder %s109, %s111
    %p118 = scmp.eq.s32.totalorder %s17, 1
    %p119 = por %p117, %p118
    %p120 = scmp.ne.s32.totalorder %s111, %s112
    %p121 = scmp.eq.s32.totalorder %s17, 0
    %p122 = por %p120, %p121
    %p123 = scmp.ne.s32.totalorder %s111, %s112
    %p124 = scmp.eq.s32.totalorder %s18, 1
    %p125 = por %p123, %p124
    %p127 = scmp.ne.s32.totalorder %s112, %s126
    %p128 = scmp.eq.s32.totalorder %s18, 0
    %p129 = por %p127, %p128
    %s131 = sadd.s32 %s130, 1
    %p134 = scmp.eq.s32.totalorder %s12, 1
    %p135 = scmp.ne.s32.totalorder %s130, %s132
    %p136 = scmp.eq.s32.totalorder %s12, 0
    %p137 = por %p135, %p136
    %p138 = scmp.ne.s32.totalorder %s130, %s132
    %p139 = scmp.eq.s32.totalorder %s17, 1
    %p140 = por %p138, %p139
    %p141 = scmp.ne.s32.totalorder %s132, %s133
    %p142 = scmp.eq.s32.totalorder %s17, 0
    %p143 = por %p141, %p142
    %p144 = scmp.ne.s32.totalorder %s132, %s133
    %p145 = scmp.eq.s32.totalorder %s18, 1
    %p146 = por %p144, %p145
    %p148 = scmp.ne.s32.totalorder %s133, %s147
    %p149 = scmp.eq.s32.totalorder %s18, 0
    %p150 = por %p148, %p149
    %s151 = ssub.s32 %s12, %s19
    %p152 = scmp.eq.s32.totalorder %s151, 0
    %s154 = sadd.s32 %s153, 1
    %s155 = scalar_select %p152, %s153, %s154
    %p158 = pneg %p152
    %p159 = scmp.eq.s32.totalorder %s12, 1
    %p160 = por %p158, %p159
    %p161 = scmp.ne.s32.totalorder %s153, %s156
    %p162 = scmp.eq.s32.totalorder %s12, 0
    %p163 = por %p161, %p162
    %p164 = scmp.ne.s32.totalorder %s153, %s156
    %p165 = scmp.eq.s32.totalorder %s17, 1
    %p166 = por %p164, %p165
    %p167 = scmp.ne.s32.totalorder %s156, %s157
    %p168 = scmp.eq.s32.totalorder %s17, 0
    %p169 = por %p167, %p168
    %p170 = scmp.ne.s32.totalorder %s156, %s157
    %p171 = scmp.eq.s32.totalorder %s18, 1
    %p172 = por %p170, %p171
    %p174 = scmp.ne.s32.totalorder %s157, %s173
    %p175 = scmp.eq.s32.totalorder %s18, 0
    %p176 = por %p174, %p175
    %p177 = scmp.le.s32.totalorder 1, %s12
    %p178 = scmp.lt.s32.totalorder %s12, 3
    %p179 = pnand %p177, %p178
    %p180 = pneg %p179
    // Predicated region
    $region9: #{inverted_residual_forward.1} parent=5 // pred_check
      _
    $region10: #{inverted_residual_forward.1} parent=5 // pred_check_branch
      %182 = sbr.rel (%p179) target = $region12
    $region11: #{inverted_residual_forward.1} parent=5 // pred_region
      %s183 = ssub.s32 %s12, 1
      // Predicated region
      $region13: #{inverted_residual_forward.1} parent=11 // pred_check
        %p184 = pneg %p59
      $region14: #{inverted_residual_forward.1} parent=11 // pred_check_branch
        %186 = sbr.rel (%p184) target = $region16
      $region15: #{inverted_residual_forward.1} parent=11 // pred_region
        _
      $region16: #{inverted_residual_forward.1} parent=11 // pred_fallthru
        _
      // Predicated region
      $region17: #{inverted_residual_forward.1} parent=11 // pred_check
        %p187 = pneg %p80
      $region18: #{inverted_residual_forward.1} parent=11 // pred_check_branch
        %189 = sbr.rel (%p187) target = $region20
      $region19: #{inverted_residual_forward.1} parent=11 // pred_region
        _
      $region20: #{inverted_residual_forward.1} parent=11 // pred_fallthru
        _
      // Predicated region
      $region21: #{inverted_residual_forward.1} parent=11 // pred_check
        %p190 = pneg %p101
      $region22: #{inverted_residual_forward.1} parent=11 // pred_check_branch
        %192 = sbr.rel (%p190) target = $region24
      $region23: #{inverted_residual_forward.1} parent=11 // pred_region
        _
      $region24: #{inverted_residual_forward.1} parent=11 // pred_fallthru
        _
      // Predicated region
      $region25: #{inverted_residual_forward.1} parent=11 // pred_check
        %p193 = pneg %p122
      $region26: #{inverted_residual_forward.1} parent=11 // pred_check_branch
        %195 = sbr.rel (%p193) target = $region28
      $region27: #{inverted_residual_forward.1} parent=11 // pred_region
        _
      $region28: #{inverted_residual_forward.1} parent=11 // pred_fallthru
        _
      // Predicated region
      $region29: #{inverted_residual_forward.1} parent=11 // pred_check
        %p196 = pneg %p143
      $region30: #{inverted_residual_forward.1} parent=11 // pred_check_branch
        %198 = sbr.rel (%p196) target = $region32
      $region31: #{inverted_residual_forward.1} parent=11 // pred_region
        _
      $region32: #{inverted_residual_forward.1} parent=11 // pred_fallthru
        _
    $region12: #{inverted_residual_forward.1} parent=5 // pred_fallthru
      _
    %p199 = scmp.lt.s32.totalorder %s12, 2
    // Predicated region
    $region33: #{inverted_residual_forward.1} parent=5 // pred_check
      %p200 = pneg %p199
    $region34: #{inverted_residual_forward.1} parent=5 // pred_check_branch
      %202 = sbr.rel (%p200) target = $region36
    $region35: #{inverted_residual_forward.1} parent=5 // pred_region
      // Predicated region
      $region37: #{inverted_residual_forward.1} parent=35 // pred_check
        %p203 = pneg %p32
      $region38: #{inverted_residual_forward.1} parent=35 // pred_check_branch
        %205 = sbr.rel (%p203) target = $region40
      $region39: #{inverted_residual_forward.1} parent=35 // pred_region
        %p206 = scmp.lt.s32.totalorder %s12, 1
        %s207 = scalar_select %p206, %s12, 1
        %s208 = smul.addr %s207, 2
        %s209 = smul.addr %s208, 4
        %s210 = scalar_lea.vmem %s0, %s209
      $region40: #{inverted_residual_forward.1} parent=35 // pred_fallthru
        _
    $region36: #{inverted_residual_forward.1} parent=5 // pred_fallthru
      _
    %p211 = scmp.le.s32.totalorder 1, %s12
    %p212 = scmp.lt.s32.totalorder %s12, 3
    %p213 = pnand %p211, %p212
    %p214 = pneg %p213
    // Predicated region
    $region41: #{inverted_residual_forward.1} parent=5 // pred_check
      _
    $region42: #{inverted_residual_forward.1} parent=5 // pred_check_branch
      %216 = sbr.rel (%p213) target = $region44
    $region43: #{inverted_residual_forward.1} parent=5 // pred_region
      %s217 = ssub.s32 %s12, 1
      %p218 = scmp.lt.s32.totalorder %s17, 1
      %s219 = scalar_select %p218, %s17, 1
      %s220 = smul.addr %s219, 2
      %s221 = smul.addr %s220, 4
      %s222 = scalar_lea.vmem %s0, %s221
      %p223 = pneg %p38
      %p224 = pneg %p35
      %p225 = pneg %p59
      %p226 = pneg %p56
      %p227 = pneg %p80
      %p228 = pneg %p77
      %p229 = pneg %p101
      %p230 = pneg %p98
      %p231 = pneg %p122
      %p232 = pneg %p119
      %p233 = pneg %p143
      %p234 = pneg %p140
      %p235 = pneg %p169
      %p236 = pneg %p166
      %p237 = scmp.lt.s32.totalorder %s17, 1
      %s238 = scalar_select %p237, %s17, 1
      %s239 = smul.addr %s238, 4
      %s240 = smul.addr %s239, 2
      %s241 = scalar_lea.vmem %s6, %s240
      %p242 = scmp.lt.s32.totalorder %s17, 1
      %s243 = scalar_select %p242, %s17, 1
      %s244 = smul.addr %s243, 2
      %s245 = smul.addr %s244, 4
      %s246 = scalar_lea.vmem %s0, %s245
      %p247 = scmp.lt.s32.totalorder %s17, 1
      %s248 = scalar_select %p247, %s17, 1
      %s249 = smul.addr %s248, 4
      %s250 = smul.addr %s249, 2
      %s251 = scalar_lea.vmem %s6, %s250
      %vm253 = vcmask 15360
      %254 = vst.msk [vmem:[#allocation2] sm:$0xff] %vm253, 0.0
      %255 = vst.msk [vmem:[#allocation2 + $0x8] sm:$0xff] %vm253, 0.0
      %256 = vst.msk [vmem:[#allocation2 + $0x10] sm:$0xff] %vm253, 0.0
      %vm257 = vcmask 9216
      %258 = vst.msk [vmem:[#allocation2 + $0x18] sm:$0x3] %vm257, 0.0
      %s259 = scalar_lea.vmem [#allocation2], 544
      %260 = vst.msk [vmem:[%s259] sm:$0xff] %vm253, 0.0
      %261 = vst.msk [vmem:[%s259 + $0x8] sm:$0xff] %vm253, 0.0
      %262 = vst.msk [vmem:[%s259 + $0x10] sm:$0xff] %vm253, 0.0
      %263 = vst.msk [vmem:[%s259 + $0x18] sm:$0x3] %vm257, 0.0
      %264 = vst.msk [vmem:[#allocation2] sm:$0xff] %vm253, 0.0
      %265 = vst.msk [vmem:[#allocation2 + $0x20] sm:$0xff] %vm253, 0.0
      %266 = vst.msk [vmem:[#allocation2 + $0x40] sm:$0xff] %vm253, 0.0
      %267 = vst.msk [vmem:[#allocation2 + $0x60] sm:$0xff] %vm253, 0.0
      %268 = vst.msk [vmem:[#allocation2 + $0x80] sm:$0xff] %vm253, 0.0
      %269 = vst.msk [vmem:[#allocation2 + $0xa0] sm:$0xff] %vm253, 0.0
      %270 = vst.msk [vmem:[#allocation2 + $0xc0] sm:$0xff] %vm253, 0.0
      %271 = vst.msk [vmem:[#allocation2 + $0xe0] sm:$0xff] %vm253, 0.0
      %272 = vst.msk [vmem:[#allocation2 + $0x100] sm:$0xff] %vm253, 0.0
      %273 = vst.msk [vmem:[#allocation2 + $0x120] sm:$0xff] %vm253, 0.0
      %274 = vst.msk [vmem:[#allocation2 + $0x140] sm:$0xff] %vm253, 0.0
      %275 = vst.msk [vmem:[#allocation2 + $0x160] sm:$0xff] %vm253, 0.0
      %276 = vst.msk [vmem:[#allocation2 + $0x180] sm:$0xff] %vm253, 0.0
      %277 = vst.msk [vmem:[#allocation2 + $0x1a0] sm:$0xff] %vm253, 0.0
      %278 = vst.msk [vmem:[#allocation2 + $0x1c0] sm:$0xff] %vm253, 0.0
      %279 = vst.msk [vmem:[#allocation2 + $0x1e0] sm:$0xff] %vm253, 0.0
      %280 = vst.msk [vmem:[#allocation2 + $0x200] sm:$0xff] %vm253, 0.0
      %281 = vst.msk [vmem:[#allocation2 + $0x220] sm:$0xff] %vm253, 0.0
      %282 = vst.msk [vmem:[#allocation2 + $0x18] sm:$0x3] %vm257, 0.0
      %283 = vst.msk [vmem:[#allocation2 + $0x38] sm:$0x3] %vm257, 0.0
      %284 = vst.msk [vmem:[#allocation2 + $0x58] sm:$0x3] %vm257, 0.0
      %285 = vst.msk [vmem:[#allocation2 + $0x78] sm:$0x3] %vm257, 0.0
      %286 = vst.msk [vmem:[#allocation2 + $0x98] sm:$0x3] %vm257, 0.0
      %287 = vst.msk [vmem:[#allocation2 + $0xb8] sm:$0x3] %vm257, 0.0
      %288 = vst.msk [vmem:[#allocation2 + $0xd8] sm:$0x3] %vm257, 0.0
      %289 = vst.msk [vmem:[#allocation2 + $0xf8] sm:$0x3] %vm257, 0.0
      %290 = vst.msk [vmem:[#allocation2 + $0x118] sm:$0x3] %vm257, 0.0
      %291 = vst.msk [vmem:[#allocation2 + $0x138] sm:$0x3] %vm257, 0.0
      %292 = vst.msk [vmem:[#allocation2 + $0x158] sm:$0x3] %vm257, 0.0
      %293 = vst.msk [vmem:[#allocation2 + $0x178] sm:$0x3] %vm257, 0.0
      %294 = vst.msk [vmem:[#allocation2 + $0x198] sm:$0x3] %vm257, 0.0
      %295 = vst.msk [vmem:[#allocation2 + $0x1b8] sm:$0x3] %vm257, 0.0
      %296 = vst.msk [vmem:[#allocation2 + $0x1d8] sm:$0x3] %vm257, 0.0
      %297 = vst.msk [vmem:[#allocation2 + $0x1f8] sm:$0x3] %vm257, 0.0
      %298 = vst.msk [vmem:[#allocation2 + $0x218] sm:$0x3] %vm257, 0.0
      %299 = vst.msk [vmem:[#allocation2 + $0x238] sm:$0x3] %vm257, 0.0
      %v300 = vld [vmem:[%s246] sm:$0x33]
      %v301 = vld [vmem:[%s246] sm:$0xcc]
      %v303 = vcombine.high %v301, %v301
      %v304 = vrot.slane %v301, 2
      %v305 = vrot.slane %v303, 2
      %308 = vxpose.xlu0.b32.start [1/16] %v304, 128
      %309 = vxpose.xlu0.b32.cont [2/16] 0.0, 128
      %310 = vxpose.xlu0.b32.cont [3/16] 0.0, 128
      %311 = vxpose.xlu0.b32.cont [4/16] 0.0, 128
      %312 = vxpose.xlu0.b32.cont [5/16] 0.0, 128
      %313 = vxpose.xlu0.b32.cont [6/16] 0.0, 128
      %314 = vxpose.xlu0.b32.cont [7/16] 0.0, 128
      %315 = vxpose.xlu0.b32.cont [8/16] 0.0, 128
      %316 = vxpose.xlu0.b32.cont [9/16] 0.0, 128
      %317 = vxpose.xlu0.b32.cont [10/16] 0.0, 128
      %318 = vxpose.xlu0.b32.cont [11/16] 0.0, 128
      %319 = vxpose.xlu0.b32.cont [12/16] 0.0, 128
      %320 = vxpose.xlu0.b32.cont [13/16] 0.0, 128
      %321 = vxpose.xlu0.b32.cont [14/16] 0.0, 128
      %322 = vxpose.xlu0.b32.cont [15/16] 0.0, 128
      %323 = vxpose.xlu0.b32.end [16/16] 0.0, 128
      %v324 = vpop.trf.xlu0
      %v325 = vpop.trf.xlu0
      %v326 = vpop.trf.xlu0
      %v327 = vpop.trf.xlu0
      %v328 = vpop.trf.xlu0
      %v329 = vpop.trf.xlu0
      %v330 = vpop.trf.xlu0
      %v331 = vpop.trf.xlu0
      %v332 = vpop.trf.xlu0
      %v333 = vpop.trf.xlu0
      %v334 = vpop.trf.xlu0
      %v335 = vpop.trf.xlu0
      %v336 = vpop.trf.xlu0
      %v337 = vpop.trf.xlu0
      %v338 = vpop.trf.xlu0
      %v339 = vpop.trf.xlu0
      %340 = vxpose.xlu0.b32.start [1/16] %v305, 128
      %341 = vxpose.xlu0.b32.cont [2/16] 0.0, 128
      %342 = vxpose.xlu0.b32.cont [3/16] 0.0, 128
      %343 = vxpose.xlu0.b32.cont [4/16] 0.0, 128
      %344 = vxpose.xlu0.b32.cont [5/16] 0.0, 128
      %345 = vxpose.xlu0.b32.cont [6/16] 0.0, 128
      %346 = vxpose.xlu0.b32.cont [7/16] 0.0, 128
      %347 = vxpose.xlu0.b32.cont [8/16] 0.0, 128
      %348 = vxpose.xlu0.b32.cont [9/16] 0.0, 128
      %349 = vxpose.xlu0.b32.cont [10/16] 0.0, 128
      %350 = vxpose.xlu0.b32.cont [11/16] 0.0, 128
      %351 = vxpose.xlu0.b32.cont [12/16] 0.0, 128
      %352 = vxpose.xlu0.b32.cont [13/16] 0.0, 128
      %353 = vxpose.xlu0.b32.cont [14/16] 0.0, 128
      %354 = vxpose.xlu0.b32.cont [15/16] 0.0, 128
      %355 = vxpose.xlu0.b32.end [16/16] 0.0, 128
      %v356 = vpop.trf.xlu0
      %v357 = vpop.trf.xlu0
      %v358 = vpop.trf.xlu0
      %v359 = vpop.trf.xlu0
      %v360 = vpop.trf.xlu0
      %v361 = vpop.trf.xlu0
      %v362 = vpop.trf.xlu0
      %v363 = vpop.trf.xlu0
      %v364 = vpop.trf.xlu0
      %v365 = vpop.trf.xlu0
      %v366 = vpop.trf.xlu0
      %v367 = vpop.trf.xlu0
      %v368 = vpop.trf.xlu0
      %v369 = vpop.trf.xlu0
      %v370 = vpop.trf.xlu0
      %v371 = vpop.trf.xlu0
      %v372 = vpack.c.bf16 %v325, %v324
      %v373 = vpack.c.bf16 %v327, %v326
      %v374 = vpack.c.bf16 %v329, %v328
      %v375 = vpack.c.bf16 %v331, %v330
      %v376 = vpack.c.bf16 %v333, %v332
      %v377 = vpack.c.bf16 %v335, %v334
      %v378 = vpack.c.bf16 %v337, %v336
      %v379 = vpack.c.bf16 %v339, %v338
      %v380 = vpack.c.bf16 %v357, %v356
      %v381 = vpack.c.bf16 %v359, %v358
      %v382 = vpack.c.bf16 %v361, %v360
      %v383 = vpack.c.bf16 %v363, %v362
      %v384 = vpack.c.bf16 %v365, %v364
      %v385 = vpack.c.bf16 %v367, %v366
      %v386 = vpack.c.bf16 %v369, %v368
      %v387 = vpack.c.bf16 %v371, %v370
      %v388 = vld [vmem:[%s1] sm:$0x1]
      %v389 = vld [vmem:[%s2] sm:$0x1]
      %v391 = vlaneseq
      %v392 = vshrl.u32 %v391, 7
      %v393 = vsub.s32 0, %v392
      %v394 = vrot.slane %v389, %v393
      %v397 = vsel %vm253, %v372, 0
      %v400 = vsel %vm253, %v373, 0
      %v403 = vsel %vm253, %v374, 0
      %v406 = vsel %vm253, %v375, 0
      %v409 = vsel %vm253, %v376, 0
      %v412 = vsel %vm253, %v377, 0
      %v415 = vsel %vm253, %v378, 0
      %v418 = vsel %vm253, %v379, 0
      %v421 = vsel %vm253, %v380, 0
      %v424 = vsel %vm253, %v381, 0
      %v427 = vsel %vm253, %v382, 0
      %v430 = vsel %vm253, %v383, 0
      %v433 = vsel %vm253, %v384, 0
      %v436 = vsel %vm253, %v385, 0
      %v439 = vsel %vm253, %v386, 0
      %v442 = vsel %vm253, %v387, 0
      %vm444 = vcmask 1040384
      %v446 = vsel %vm444, %v388, 0
      %448 = vmatprep.subr.bf16.mxu0 0
      %449 = vmatpush1.bf16.msra.mxu0 %v446
      %450 = vmatprep.subr.bf16.mxu0 0
      %451 = vmatpush1.bf16.msra.mxu0 0
      %452 = vmatprep.subr.bf16.mxu0 0
      %453 = vmatpush1.bf16.msra.mxu0 0
      %454 = vmatprep.subr.bf16.mxu0 0
      %455 = vmatpush1.bf16.msra.mxu0 0
      %456 = vmatprep.subr.bf16.mxu0 0
      %457 = vmatpush1.bf16.msra.mxu0 0
      %458 = vmatprep.subr.bf16.mxu0 0
      %459 = vmatpush1.bf16.msra.mxu0 0
      %460 = vmatprep.subr.bf16.mxu0 0
      %461 = vmatpush1.bf16.msra.mxu0 0
      %462 = vmatprep.subr.bf16.mxu0 0
      %463 = vmatpush1.bf16.msra.mxu0 0
      %464 = vmatprep.subr.bf16.mxu0 0
      %465 = vmatpush1.bf16.msra.mxu0 0
      %466 = vmatprep.subr.bf16.mxu0 0
      %467 = vmatpush1.bf16.msra.mxu0 0
      %468 = vmatprep.subr.bf16.mxu0 0
      %469 = vmatpush1.bf16.msra.mxu0 0
      %470 = vmatprep.subr.bf16.mxu0 0
      %471 = vmatpush1.bf16.msra.mxu0 0
      %472 = vmatprep.subr.bf16.mxu0 0
      %473 = vmatpush1.bf16.msra.mxu0 0
      %474 = vmatprep.subr.bf16.mxu0 0
      %475 = vmatpush1.bf16.msra.mxu0 0
      %476 = vmatprep.subr.bf16.mxu0 0
      %477 = vmatpush1.bf16.msra.mxu0 0
      %478 = vmatprep.subr.bf16.mxu0 0
      %479 = vmatpush1.bf16.msra.mxu0 0
      %480 = vmatprep.mubr.bf16.mxu0 0
      %481 = vmatmul.mubr.bf16.gmra.mrb[0].mxu0 %v397
      %v482 = vpop.f32.mrb[0].mxu0
      %v483 = vadd.f32 %v394, %v482
      %v484 = vpop.f32.mrb[0].mxu0
      %v485 = vpop.f32.mrb[0].mxu0
      %v486 = vadd.f32 %v394, %v485
      %v487 = vpop.f32.mrb[0].mxu0
      %488 = vmatprep.mubr.bf16.mxu0 0
      %489 = vmatmul.mubr.bf16.gmra.mrb[0].mxu0 %v400
      %v490 = vpop.f32.mrb[0].mxu0
      %v491 = vadd.f32 %v394, %v490
      %v492 = vpop.f32.mrb[0].mxu0
      %v493 = vpop.f32.mrb[0].mxu0
      %v494 = vadd.f32 %v394, %v493
      %v495 = vpop.f32.mrb[0].mxu0
      %496 = vmatprep.mubr.bf16.mxu0 0
      %497 = vmatmul.mubr.bf16.gmra.mrb[0].mxu0 %v403
      %v498 = vpop.f32.mrb[0].mxu0
      %v499 = vadd.f32 %v394, %v498
      %v500 = vpop.f32.mrb[0].mxu0
      %v501 = vpop.f32.mrb[0].mxu0
      %v502 = vadd.f32 %v394, %v501
      %v503 = vpop.f32.mrb[0].mxu0
      %504 = vmatprep.mubr.bf16.mxu0 0
      %505 = vmatmul.mubr.bf16.gmra.mrb[0].mxu0 %v406
      %v506 = vpop.f32.mrb[0].mxu0
      %v507 = vadd.f32 %v394, %v506
      %v508 = vpop.f32.mrb[0].mxu0
      %v509 = vpop.f32.mrb[0].mxu0
      %v510 = vadd.f32 %v394, %v509
      %v511 = vpop.f32.mrb[0].mxu0
      %512 = vmatprep.mubr.bf16.mxu0 0
      %513 = vmatmul.mubr.bf16.gmra.mrb[0].mxu0 %v409
      %v514 = vpop.f32.mrb[0].mxu0
      %v515 = vadd.f32 %v394, %v514
      %v516 = vpop.f32.mrb[0].mxu0
      %v517 = vpop.f32.mrb[0].mxu0
      %v518 = vadd.f32 %v394, %v517
      %v519 = vpop.f32.mrb[0].mxu0
      %520 = vmatprep.mubr.bf16.mxu0 0
      %521 = vmatmul.mubr.bf16.gmra.mrb[0].mxu0 %v412
      %v522 = vpop.f32.mrb[0].mxu0
      %v523 = vadd.f32 %v394, %v522
      %v524 = vpop.f32.mrb[0].mxu0
      %v525 = vpop.f32.mrb[0].mxu0
      %v526 = vadd.f32 %v394, %v525
      %v527 = vpop.f32.mrb[0].mxu0
      %528 = vmatprep.mubr.bf16.mxu0 0
      %529 = vmatmul.mubr.bf16.gmra.mrb[0].mxu0 %v415
      %v530 = vpop.f32.mrb[0].mxu0
      %v531 = vadd.f32 %v394, %v530
      %v532 = vpop.f32.mrb[0].mxu0
      %v533 = vpop.f32.mrb[0].mxu0
      %v534 = vadd.f32 %v394, %v533
      %v535 = vpop.f32.mrb[0].mxu0
      %536 = vmatprep.mubr.bf16.mxu0 0
      %537 = vmatmul.mubr.bf16.gmra.mrb[0].mxu0 %v418
      %v538 = vpop.f32.mrb[0].mxu0
      %v539 = vadd.f32 %v394, %v538
      %v540 = vpop.f32.mrb[0].mxu0
      %v541 = vpop.f32.mrb[0].mxu0
      %v542 = vadd.f32 %v394, %v541
      %v543 = vpop.f32.mrb[0].mxu0
      %544 = vmatprep.mubr.bf16.mxu0 0
      %545 = vmatmul.mubr.bf16.gmra.mrb[0].mxu0 %v421
      %v546 = vpop.f32.mrb[0].mxu0
      %v547 = vadd.f32 %v394, %v546
      %v548 = vpop.f32.mrb[0].mxu0
      %v549 = vpop.f32.mrb[0].mxu0
      %v550 = vadd.f32 %v394, %v549
      %v551 = vpop.f32.mrb[0].mxu0
      %552 = vmatprep.mubr.bf16.mxu0 0
      %553 = vmatmul.mubr.bf16.gmra.mrb[0].mxu0 %v424
      %v554 = vpop.f32.mrb[0].mxu0
      %v555 = vadd.f32 %v394, %v554
      %v556 = vpop.f32.mrb[0].mxu0
      %v557 = vpop.f32.mrb[0].mxu0
      %v558 = vadd.f32 %v394, %v557
      %v559 = vpop.f32.mrb[0].mxu0
      %560 = vmatprep.mubr.bf16.mxu0 0
      %561 = vmatmul.mubr.bf16.gmra.mrb[0].mxu0 %v427
      %v562 = vpop.f32.mrb[0].mxu0
      %v563 = vadd.f32 %v394, %v562
      %v564 = vpop.f32.mrb[0].mxu0
      %v565 = vpop.f32.mrb[0].mxu0
      %v566 = vadd.f32 %v394, %v565
      %v567 = vpop.f32.mrb[0].mxu0
      %568 = vmatprep.mubr.bf16.mxu0 0
      %569 = vmatmul.mubr.bf16.gmra.mrb[0].mxu0 %v430
      %v570 = vpop.f32.mrb[0].mxu0
      %v571 = vadd.f32 %v394, %v570
      %v572 = vpop.f32.mrb[0].mxu0
      %v573 = vpop.f32.mrb[0].mxu0
      %v574 = vadd.f32 %v394, %v573
      %v575 = vpop.f32.mrb[0].mxu0
      %576 = vmatprep.mubr.bf16.mxu0 0
      %577 = vmatmul.mubr.bf16.gmra.mrb[0].mxu0 %v433
      %v578 = vpop.f32.mrb[0].mxu0
      %v579 = vadd.f32 %v394, %v578
      %v580 = vpop.f32.mrb[0].mxu0
      %v581 = vpop.f32.mrb[0].mxu0
      %v582 = vadd.f32 %v394, %v581
      %v583 = vpop.f32.mrb[0].mxu0
      %584 = vmatprep.mubr.bf16.mxu0 0
      %585 = vmatmul.mubr.bf16.gmra.mrb[0].mxu0 %v436
      %v586 = vpop.f32.mrb[0].mxu0
      %v587 = vadd.f32 %v394, %v586
      %v588 = vpop.f32.mrb[0].mxu0
      %v589 = vpop.f32.mrb[0].mxu0
      %v590 = vadd.f32 %v394, %v589
      %v591 = vpop.f32.mrb[0].mxu0
      %592 = vmatprep.mubr.bf16.mxu0 0
      %593 = vmatmul.mubr.bf16.gmra.mrb[0].mxu0 %v439
      %v594 = vpop.f32.mrb[0].mxu0
      %v595 = vadd.f32 %v394, %v594
      %v596 = vpop.f32.mrb[0].mxu0
      %v597 = vpop.f32.mrb[0].mxu0
      %v598 = vadd.f32 %v394, %v597
      %v599 = vpop.f32.mrb[0].mxu0
      %600 = vmatprep.mubr.bf16.mxu0 0
      %601 = vmatmul.mubr.bf16.gmra.mrb[0].mxu0 %v442
      %v602 = vpop.f32.mrb[0].mxu0
      %v603 = vadd.f32 %v394, %v602
      %v604 = vpop.f32.mrb[0].mxu0
      %v605 = vpop.f32.mrb[0].mxu0
      %v606 = vadd.f32 %v394, %v605
      %v607 = vpop.f32.mrb[0].mxu0
      %608 = vdwg.mxu0
      %v609 = vmax.f32 %v483, 0.0
      %v610 = vmax.f32 %v486, 0.0
      %v611 = vmax.f32 %v491, 0.0
      %v612 = vmax.f32 %v494, 0.0
      %v613 = vmax.f32 %v499, 0.0
      %v614 = vmax.f32 %v502, 0.0
      %v615 = vmax.f32 %v507, 0.0
      %v616 = vmax.f32 %v510, 0.0
      %v617 = vmax.f32 %v515, 0.0
      %v618 = vmax.f32 %v518, 0.0
      %v619 = vmax.f32 %v523, 0.0
      %v620 = vmax.f32 %v526, 0.0
      %v621 = vmax.f32 %v531, 0.0
      %v622 = vmax.f32 %v534, 0.0
      %v623 = vmax.f32 %v539, 0.0
      %v624 = vmax.f32 %v542, 0.0
      %v625 = vmax.f32 %v547, 0.0
      %v626 = vmax.f32 %v550, 0.0
      %v627 = vmax.f32 %v555, 0.0
      %v628 = vmax.f32 %v558, 0.0
      %v629 = vmax.f32 %v563, 0.0
      %v630 = vmax.f32 %v566, 0.0
      %v631 = vmax.f32 %v571, 0.0
      %v632 = vmax.f32 %v574, 0.0
      %v633 = vmax.f32 %v579, 0.0
      %v634 = vmax.f32 %v582, 0.0
      %v635 = vmax.f32 %v587, 0.0
      %v636 = vmax.f32 %v590, 0.0
      %v637 = vmax.f32 %v595, 0.0
      %v638 = vmax.f32 %v598, 0.0
      %v639 = vmax.f32 %v603, 0.0
      %v640 = vmax.f32 %v606, 0.0
      %s641 = scalar_lea.vmem [#allocation2], 32
      %642 = vst.msk [vmem:[%s641 + $0x8] sm:$0xff] %vm253, %v609
      %643 = vst.msk [vmem:[%s641 + $0x10] sm:$0xff] %vm253, %v610
      %644 = vst.msk [vmem:[%s641 + $0x28] sm:$0xff] %vm253, %v611
      %645 = vst.msk [vmem:[%s641 + $0x30] sm:$0xff] %vm253, %v612
      %646 = vst.msk [vmem:[%s641 + $0x48] sm:$0xff] %vm253, %v613
      %647 = vst.msk [vmem:[%s641 + $0x50] sm:$0xff] %vm253, %v614
      %648 = vst.msk [vmem:[%s641 + $0x68] sm:$0xff] %vm253, %v615
      %649 = vst.msk [vmem:[%s641 + $0x70] sm:$0xff] %vm253, %v616
      %650 = vst.msk [vmem:[%s641 + $0x88] sm:$0xff] %vm253, %v617
      %651 = vst.msk [vmem:[%s641 + $0x90] sm:$0xff] %vm253, %v618
      %652 = vst.msk [vmem:[%s641 + $0xa8] sm:$0xff] %vm253, %v619
      %653 = vst.msk [vmem:[%s641 + $0xb0] sm:$0xff] %vm253, %v620
      %654 = vst.msk [vmem:[%s641 + $0xc8] sm:$0xff] %vm253, %v621
      %655 = vst.msk [vmem:[%s641 + $0xd0] sm:$0xff] %vm253, %v622
      %656 = vst.msk [vmem:[%s641 + $0xe8] sm:$0xff] %vm253, %v623
      %657 = vst.msk [vmem:[%s641 + $0xf0] sm:$0xff] %vm253, %v624
      %658 = vst.msk [vmem:[%s641 + $0x108] sm:$0xff] %vm253, %v625
      %659 = vst.msk [vmem:[%s641 + $0x110] sm:$0xff] %vm253, %v626
      %660 = vst.msk [vmem:[%s641 + $0x128] sm:$0xff] %vm253, %v627
      %661 = vst.msk [vmem:[%s641 + $0x130] sm:$0xff] %vm253, %v628
      %662 = vst.msk [vmem:[%s641 + $0x148] sm:$0xff] %vm253, %v629
      %663 = vst.msk [vmem:[%s641 + $0x150] sm:$0xff] %vm253, %v630
      %664 = vst.msk [vmem:[%s641 + $0x168] sm:$0xff] %vm253, %v631
      %665 = vst.msk [vmem:[%s641 + $0x170] sm:$0xff] %vm253, %v632
      %666 = vst.msk [vmem:[%s641 + $0x188] sm:$0xff] %vm253, %v633
      %667 = vst.msk [vmem:[%s641 + $0x190] sm:$0xff] %vm253, %v634
      %668 = vst.msk [vmem:[%s641 + $0x1a8] sm:$0xff] %vm253, %v635
      %669 = vst.msk [vmem:[%s641 + $0x1b0] sm:$0xff] %vm253, %v636
      %670 = vst.msk [vmem:[%s641 + $0x1c8] sm:$0xff] %vm253, %v637
      %671 = vst.msk [vmem:[%s641 + $0x1d0] sm:$0xff] %vm253, %v638
      %672 = vst.msk [vmem:[%s641 + $0x1e8] sm:$0xff] %vm253, %v639
      %673 = vst.msk [vmem:[%s641 + $0x1f0] sm:$0xff] %vm253, %v640
      %v674 = vld [vmem:[%s3] sm:$0x7]
      %v675 = vld [vmem:[%s3 + $0x4] sm:$0x7]
      %v676 = vld [vmem:[%s3 + $0x8] sm:$0x7]
      %v677 = vld [vmem:[#allocation2 + $0x7] sm:$0xff]
      %v678 = vld [vmem:[#allocation2 + $0xf] sm:$0xff]
      %v679 = vld [vmem:[#allocation2 + $0x27] sm:$0xff]
      %v680 = vld [vmem:[#allocation2 + $0x2f] sm:$0xff]
      %v681 = vld [vmem:[#allocation2 + $0x47] sm:$0xff]
      %v682 = vld [vmem:[#allocation2 + $0x4f] sm:$0xff]
      %v683 = vld [vmem:[#allocation2 + $0x67] sm:$0xff]
      %v684 = vld [vmem:[#allocation2 + $0x6f] sm:$0xff]
      %v685 = vld [vmem:[#allocation2 + $0x87] sm:$0xff]
      %v686 = vld [vmem:[#allocation2 + $0x8f] sm:$0xff]
      %v687 = vld [vmem:[#allocation2 + $0xa7] sm:$0xff]
      %v688 = vld [vmem:[#allocation2 + $0xaf] sm:$0xff]
      %v689 = vld [vmem:[#allocation2 + $0xc7] sm:$0xff]
      %v690 = vld [vmem:[#allocation2 + $0xcf] sm:$0xff]
      %v691 = vld [vmem:[#allocation2 + $0xe7] sm:$0xff]
      %v692 = vld [vmem:[#allocation2 + $0xef] sm:$0xff]
      %v693 = vld [vmem:[#allocation2 + $0x107] sm:$0xff]
      %v694 = vld [vmem:[#allocation2 + $0x10f] sm:$0xff]
      %v695 = vld [vmem:[#allocation2 + $0x127] sm:$0xff]
      %v696 = vld [vmem:[#allocation2 + $0x12f] sm:$0xff]
      %v697 = vld [vmem:[#allocation2 + $0x147] sm:$0xff]
      %v698 = vld [vmem:[#allocation2 + $0x14f] sm:$0xff]
      %v699 = vld [vmem:[#allocation2 + $0x167] sm:$0xff]
      %v700 = vld [vmem:[#allocation2 + $0x16f] sm:$0xff]
      %v701 = vld [vmem:[#allocation2 + $0x187] sm:$0xff]
      %v702 = vld [vmem:[#allocation2 + $0x18f] sm:$0xff]
      %v703 = vld [vmem:[#allocation2 + $0x1a7] sm:$0xff]
      %v704 = vld [vmem:[#allocation2 + $0x1af] sm:$0xff]
      %v705 = vld [vmem:[#allocation2 + $0x1c7] sm:$0xff]
      %v706 = vld [vmem:[#allocation2 + $0x1cf] sm:$0xff]
      %v707 = vld [vmem:[#allocation2 + $0x1e7] sm:$0xff]
      %v708 = vld [vmem:[#allocation2 + $0x1ef] sm:$0xff]
      %v709 = vlaneseq
      %v710 = vshrl.u32 %v709, 7
      %v711 = vsub.s32 0, %v710
      %v712 = vrot.slane %v674, %v711
      %v713 = vmul.f32 %v677, %v712
      %v714 = vmul.f32 %v678, %v712
      %v715 = vmul.f32 %v679, %v712
      %v716 = vmul.f32 %v680, %v712
      %v717 = vmul.f32 %v681, %v712
      %v718 = vmul.f32 %v682, %v712
      %v719 = vmul.f32 %v683, %v712
      %v720 = vmul.f32 %v684, %v712
      %v721 = vmul.f32 %v685, %v712
      %v722 = vmul.f32 %v686, %v712
      %v723 = vmul.f32 %v687, %v712
      %v724 = vmul.f32 %v688, %v712
      %v725 = vmul.f32 %v689, %v712
      %v726 = vmul.f32 %v690, %v712
      %v727 = vmul.f32 %v691, %v712
      %v728 = vmul.f32 %v692, %v712
      %v729 = vmul.f32 %v693, %v712
      %v730 = vmul.f32 %v694, %v712
      %v731 = vmul.f32 %v695, %v712
      %v732 = vmul.f32 %v696, %v712
      %v733 = vmul.f32 %v697, %v712
      %v734 = vmul.f32 %v698, %v712
      %v735 = vmul.f32 %v699, %v712
      %v736 = vmul.f32 %v700, %v712
      %v737 = vmul.f32 %v701, %v712
      %v738 = vmul.f32 %v702, %v712
      %v739 = vmul.f32 %v703, %v712
      %v740 = vmul.f32 %v704, %v712
      %v741 = vmul.f32 %v705, %v712
      %v742 = vmul.f32 %v706, %v712
      %v743 = vmul.f32 %v707, %v712
      %v744 = vmul.f32 %v708, %v712
      %v745 = vadd.f32 %v713, 0.0
      %v746 = vadd.f32 %v714, 0.0
      %v747 = vadd.f32 %v715, 0.0
      %v748 = vadd.f32 %v716, 0.0
      %v749 = vadd.f32 %v717, 0.0
      %v750 = vadd.f32 %v718, 0.0
      %v751 = vadd.f32 %v719, 0.0
      %v752 = vadd.f32 %v720, 0.0
      %v753 = vadd.f32 %v721, 0.0
      %v754 = vadd.f32 %v722, 0.0
      %v755 = vadd.f32 %v723, 0.0
      %v756 = vadd.f32 %v724, 0.0
      %v757 = vadd.f32 %v725, 0.0
      %v758 = vadd.f32 %v726, 0.0
      %v759 = vadd.f32 %v727, 0.0
      %v760 = vadd.f32 %v728, 0.0
      %v761 = vadd.f32 %v729, 0.0
      %v762 = vadd.f32 %v730, 0.0
      %v763 = vadd.f32 %v731, 0.0
      %v764 = vadd.f32 %v732, 0.0
      %v765 = vadd.f32 %v733, 0.0
      %v766 = vadd.f32 %v734, 0.0
      %v767 = vadd.f32 %v735, 0.0
      %v768 = vadd.f32 %v736, 0.0
      %v769 = vadd.f32 %v737, 0.0
      %v770 = vadd.f32 %v738, 0.0
      %v771 = vadd.f32 %v739, 0.0
      %v772 = vadd.f32 %v740, 0.0
      %v773 = vadd.f32 %v741, 0.0
      %v774 = vadd.f32 %v742, 0.0
      %v775 = vadd.f32 %v743, 0.0
      %v776 = vadd.f32 %v744, 0.0
      %v777 = vld [vmem:[#allocation2 + $0x8] sm:$0xff]
      %v778 = vld [vmem:[#allocation2 + $0x10] sm:$0xff]
      %v779 = vld [vmem:[#allocation2 + $0x28] sm:$0xff]
      %v780 = vld [vmem:[#allocation2 + $0x30] sm:$0xff]
      %v781 = vld [vmem:[#allocation2 + $0x48] sm:$0xff]
      %v782 = vld [vmem:[#allocation2 + $0x50] sm:$0xff]
      %v783 = vld [vmem:[#allocation2 + $0x68] sm:$0xff]
      %v784 = vld [vmem:[#allocation2 + $0x70] sm:$0xff]
      %v785 = vld [vmem:[#allocation2 + $0x88] sm:$0xff]
      %v786 = vld [vmem:[#allocation2 + $0x90] sm:$0xff]
      %v787 = vld [vmem:[#allocation2 + $0xa8] sm:$0xff]
      %v788 = vld [vmem:[#allocation2 + $0xb0] sm:$0xff]
      %v789 = vld [vmem:[#allocation2 + $0xc8] sm:$0xff]
      %v790 = vld [vmem:[#allocation2 + $0xd0] sm:$0xff]
      %v791 = vld [vmem:[#allocation2 + $0xe8] sm:$0xff]
      %v792 = vld [vmem:[#allocation2 + $0xf0] sm:$0xff]
      %v793 = vld [vmem:[#allocation2 + $0x108] sm:$0xff]
      %v794 = vld [vmem:[#allocation2 + $0x110] sm:$0xff]
      %v795 = vld [vmem:[#allocation2 + $0x128] sm:$0xff]
      %v796 = vld [vmem:[#allocation2 + $0x130] sm:$0xff]
      %v797 = vld [vmem:[#allocation2 + $0x148] sm:$0xff]
      %v798 = vld [vmem:[#allocation2 + $0x150] sm:$0xff]
      %v799 = vld [vmem:[#allocation2 + $0x168] sm:$0xff]
      %v800 = vld [vmem:[#allocation2 + $0x170] sm:$0xff]
      %v801 = vld [vmem:[#allocation2 + $0x188] sm:$0xff]
      %v802 = vld [vmem:[#allocation2 + $0x190] sm:$0xff]
      %v803 = vld [vmem:[#allocation2 + $0x1a8] sm:$0xff]
      %v804 = vld [vmem:[#allocation2 + $0x1b0] sm:$0xff]
      %v805 = vld [vmem:[#allocation2 + $0x1c8] sm:$0xff]
      %v806 = vld [vmem:[#allocation2 + $0x1d0] sm:$0xff]
      %v807 = vld [vmem:[#allocation2 + $0x1e8] sm:$0xff]
      %v808 = vld [vmem:[#allocation2 + $0x1f0] sm:$0xff]
      %v809 = vlaneseq
      %v810 = vshrl.u32 %v809, 7
      %v811 = vsub.s32 1, %v810
      %v812 = vrot.slane %v674, %v811
      %v813 = vmul.f32 %v777, %v812
      %v814 = vmul.f32 %v778, %v812
      %v815 = vmul.f32 %v779, %v812
      %v816 = vmul.f32 %v780, %v812
      %v817 = vmul.f32 %v781, %v812
      %v818 = vmul.f32 %v782, %v812
      %v819 = vmul.f32 %v783, %v812
      %v820 = vmul.f32 %v784, %v812
      %v821 = vmul.f32 %v785, %v812
      %v822 = vmul.f32 %v786, %v812
      %v823 = vmul.f32 %v787, %v812
      %v824 = vmul.f32 %v788, %v812
      %v825 = vmul.f32 %v789, %v812
      %v826 = vmul.f32 %v790, %v812
      %v827 = vmul.f32 %v791, %v812
      %v828 = vmul.f32 %v792, %v812
      %v829 = vmul.f32 %v793, %v812
      %v830 = vmul.f32 %v794, %v812
      %v831 = vmul.f32 %v795, %v812
      %v832 = vmul.f32 %v796, %v812
      %v833 = vmul.f32 %v797, %v812
      %v834 = vmul.f32 %v798, %v812
      %v835 = vmul.f32 %v799, %v812
      %v836 = vmul.f32 %v800, %v812
      %v837 = vmul.f32 %v801, %v812
      %v838 = vmul.f32 %v802, %v812
      %v839 = vmul.f32 %v803, %v812
      %v840 = vmul.f32 %v804, %v812
      %v841 = vmul.f32 %v805, %v812
      %v842 = vmul.f32 %v806, %v812
      %v843 = vmul.f32 %v807, %v812
      %v844 = vmul.f32 %v808, %v812
      %v845 = vadd.f32 %v745, %v813
      %v846 = vadd.f32 %v746, %v814
      %v847 = vadd.f32 %v747, %v815
      %v848 = vadd.f32 %v748, %v816
      %v849 = vadd.f32 %v749, %v817
      %v850 = vadd.f32 %v750, %v818
      %v851 = vadd.f32 %v751, %v819
      %v852 = vadd.f32 %v752, %v820
      %v853 = vadd.f32 %v753, %v821
      %v854 = vadd.f32 %v754, %v822
      %v855 = vadd.f32 %v755, %v823
      %v856 = vadd.f32 %v756, %v824
      %v857 = vadd.f32 %v757, %v825
      %v858 = vadd.f32 %v758, %v826
      %v859 = vadd.f32 %v759, %v827
      %v860 = vadd.f32 %v760, %v828
      %v861 = vadd.f32 %v761, %v829
      %v862 = vadd.f32 %v762, %v830
      %v863 = vadd.f32 %v763, %v831
      %v864 = vadd.f32 %v764, %v832
      %v865 = vadd.f32 %v765, %v833
      %v866 = vadd.f32 %v766, %v834
      %v867 = vadd.f32 %v767, %v835
      %v868 = vadd.f32 %v768, %v836
      %v869 = vadd.f32 %v769, %v837
      %v870 = vadd.f32 %v770, %v838
      %v871 = vadd.f32 %v771, %v839
      %v872 = vadd.f32 %v772, %v840
      %v873 = vadd.f32 %v773, %v841
      %v874 = vadd.f32 %v774, %v842
      %v875 = vadd.f32 %v775, %v843
      %v876 = vadd.f32 %v776, %v844
      %v877 = vld [vmem:[#allocation2 + $0x9] sm:$0xff]
      %v878 = vld [vmem:[#allocation2 + $0x11] sm:$0xff]
      %v879 = vld [vmem:[#allocation2 + $0x29] sm:$0xff]
      %v880 = vld [vmem:[#allocation2 + $0x31] sm:$0xff]
      %v881 = vld [vmem:[#allocation2 + $0x49] sm:$0xff]
      %v882 = vld [vmem:[#allocation2 + $0x51] sm:$0xff]
      %v883 = vld [vmem:[#allocation2 + $0x69] sm:$0xff]
      %v884 = vld [vmem:[#allocation2 + $0x71] sm:$0xff]
      %v885 = vld [vmem:[#allocation2 + $0x89] sm:$0xff]
      %v886 = vld [vmem:[#allocation2 + $0x91] sm:$0xff]
      %v887 = vld [vmem:[#allocation2 + $0xa9] sm:$0xff]
      %v888 = vld [vmem:[#allocation2 + $0xb1] sm:$0xff]
      %v889 = vld [vmem:[#allocation2 + $0xc9] sm:$0xff]
      %v890 = vld [vmem:[#allocation2 + $0xd1] sm:$0xff]
      %v891 = vld [vmem:[#allocation2 + $0xe9] sm:$0xff]
      %v892 = vld [vmem:[#allocation2 + $0xf1] sm:$0xff]
      %v893 = vld [vmem:[#allocation2 + $0x109] sm:$0xff]
      %v894 = vld [vmem:[#allocation2 + $0x111] sm:$0xff]
      %v895 = vld [vmem:[#allocation2 + $0x129] sm:$0xff]
      %v896 = vld [vmem:[#allocation2 + $0x131] sm:$0xff]
      %v897 = vld [vmem:[#allocation2 + $0x149] sm:$0xff]
      %v898 = vld [vmem:[#allocation2 + $0x151] sm:$0xff]
      %v899 = vld [vmem:[#allocation2 + $0x169] sm:$0xff]
      %v900 = vld [vmem:[#allocation2 + $0x171] sm:$0xff]
      %v901 = vld [vmem:[#allocation2 + $0x189] sm:$0xff]
      %v902 = vld [vmem:[#allocation2 + $0x191] sm:$0xff]
      %v903 = vld [vmem:[#allocation2 + $0x1a9] sm:$0xff]
      %v904 = vld [vmem:[#allocation2 + $0x1b1] sm:$0xff]
      %v905 = vld [vmem:[#allocation2 + $0x1c9] sm:$0xff]
      %v906 = vld [vmem:[#allocation2 + $0x1d1] sm:$0xff]
      %v907 = vld [vmem:[#allocation2 + $0x1e9] sm:$0xff]
      %v908 = vld [vmem:[#allocation2 + $0x1f1] sm:$0xff]
      %v909 = vlaneseq
      %v910 = vshrl.u32 %v909, 7
      %v911 = vsub.s32 2, %v910
      %v912 = vrot.slane %v674, %v911
      %v913 = vmul.f32 %v877, %v912
      %v914 = vmul.f32 %v878, %v912
      %v915 = vmul.f32 %v879, %v912
      %v916 = vmul.f32 %v880, %v912
      %v917 = vmul.f32 %v881, %v912
      %v918 = vmul.f32 %v882, %v912
      %v919 = vmul.f32 %v883, %v912
      %v920 = vmul.f32 %v884, %v912
      %v921 = vmul.f32 %v885, %v912
      %v922 = vmul.f32 %v886, %v912
      %v923 = vmul.f32 %v887, %v912
      %v924 = vmul.f32 %v888, %v912
      %v925 = vmul.f32 %v889, %v912
      %v926 = vmul.f32 %v890, %v912
      %v927 = vmul.f32 %v891, %v912
      %v928 = vmul.f32 %v892, %v912
      %v929 = vmul.f32 %v893, %v912
      %v930 = vmul.f32 %v894, %v912
      %v931 = vmul.f32 %v895, %v912
      %v932 = vmul.f32 %v896, %v912
      %v933 = vmul.f32 %v897, %v912
      %v934 = vmul.f32 %v898, %v912
      %v935 = vmul.f32 %v899, %v912
      %v936 = vmul.f32 %v900, %v912
      %v937 = vmul.f32 %v901, %v912
      %v938 = vmul.f32 %v902, %v912
      %v939 = vmul.f32 %v903, %v912
      %v940 = vmul.f32 %v904, %v912
      %v941 = vmul.f32 %v905, %v912
      %v942 = vmul.f32 %v906, %v912
      %v943 = vmul.f32 %v907, %v912
      %v944 = vmul.f32 %v908, %v912
      %v945 = vadd.f32 %v845, %v913
      %v946 = vadd.f32 %v846, %v914
      %v947 = vadd.f32 %v847, %v915
      %v948 = vadd.f32 %v848, %v916
      %v949 = vadd.f32 %v849, %v917
      %v950 = vadd.f32 %v850, %v918
      %v951 = vadd.f32 %v851, %v919
      %v952 = vadd.f32 %v852, %v920
      %v953 = vadd.f32 %v853, %v921
      %v954 = vadd.f32 %v854, %v922
      %v955 = vadd.f32 %v855, %v923
      %v956 = vadd.f32 %v856, %v924
      %v957 = vadd.f32 %v857, %v925
      %v958 = vadd.f32 %v858, %v926
      %v959 = vadd.f32 %v859, %v927
      %v960 = vadd.f32 %v860, %v928
      %v961 = vadd.f32 %v861, %v929
      %v962 = vadd.f32 %v862, %v930
      %v963 = vadd.f32 %v863, %v931
      %v964 = vadd.f32 %v864, %v932
      %v965 = vadd.f32 %v865, %v933
      %v966 = vadd.f32 %v866, %v934
      %v967 = vadd.f32 %v867, %v935
      %v968 = vadd.f32 %v868, %v936
      %v969 = vadd.f32 %v869, %v937
      %v970 = vadd.f32 %v870, %v938
      %v971 = vadd.f32 %v871, %v939
      %v972 = vadd.f32 %v872, %v940
      %v973 = vadd.f32 %v873, %v941
      %v974 = vadd.f32 %v874, %v942
      %v975 = vadd.f32 %v875, %v943
      %v976 = vadd.f32 %v876, %v944
      %v977 = vld [vmem:[%s641 + $0x7] sm:$0xff]
      %v978 = vld [vmem:[%s641 + $0xf] sm:$0xff]
      %v979 = vld [vmem:[%s641 + $0x27] sm:$0xff]
      %v980 = vld [vmem:[%s641 + $0x2f] sm:$0xff]
      %v981 = vld [vmem:[%s641 + $0x47] sm:$0xff]
      %v982 = vld [vmem:[%s641 + $0x4f] sm:$0xff]
      %v983 = vld [vmem:[%s641 + $0x67] sm:$0xff]
      %v984 = vld [vmem:[%s641 + $0x6f] sm:$0xff]
      %v985 = vld [vmem:[%s641 + $0x87] sm:$0xff]
      %v986 = vld [vmem:[%s641 + $0x8f] sm:$0xff]
      %v987 = vld [vmem:[%s641 + $0xa7] sm:$0xff]
      %v988 = vld [vmem:[%s641 + $0xaf] sm:$0xff]
      %v989 = vld [vmem:[%s641 + $0xc7] sm:$0xff]
      %v990 = vld [vmem:[%s641 + $0xcf] sm:$0xff]
      %v991 = vld [vmem:[%s641 + $0xe7] sm:$0xff]
      %v992 = vld [vmem:[%s641 + $0xef] sm:$0xff]
      %v993 = vld [vmem:[%s641 + $0x107] sm:$0xff]
      %v994 = vld [vmem:[%s641 + $0x10f] sm:$0xff]
      %v995 = vld [vmem:[%s641 + $0x127] sm:$0xff]
      %v996 = vld [vmem:[%s641 + $0x12f] sm:$0xff]
      %v997 = vld [vmem:[%s641 + $0x147] sm:$0xff]
      %v998 = vld [vmem:[%s641 + $0x14f] sm:$0xff]
      %v999 = vld [vmem:[%s641 + $0x167] sm:$0xff]
      %v1000 = vld [vmem:[%s641 + $0x16f] sm:$0xff]
      %v1001 = vld [vmem:[%s641 + $0x187] sm:$0xff]
      %v1002 = vld [vmem:[%s641 + $0x18f] sm:$0xff]
      %v1003 = vld [vmem:[%s641 + $0x1a7] sm:$0xff]
      %v1004 = vld [vmem:[%s641 + $0x1af] sm:$0xff]
      %v1005 = vld [vmem:[%s641 + $0x1c7] sm:$0xff]
      %v1006 = vld [vmem:[%s641 + $0x1cf] sm:$0xff]
      %v1007 = vld [vmem:[%s641 + $0x1e7] sm:$0xff]
      %v1008 = vld [vmem:[%s641 + $0x1ef] sm:$0xff]
      %v1009 = vlaneseq
      %v1010 = vshrl.u32 %v1009, 7
      %v1011 = vsub.s32 0, %v1010
      %v1012 = vrot.slane %v675, %v1011
      %v1013 = vmul.f32 %v977, %v1012
      %v1014 = vmul.f32 %v978, %v1012
      %v1015 = vmul.f32 %v979, %v1012
      %v1016 = vmul.f32 %v980, %v1012
      %v1017 = vmul.f32 %v981, %v1012
      %v1018 = vmul.f32 %v982, %v1012
      %v1019 = vmul.f32 %v983, %v1012
      %v1020 = vmul.f32 %v984, %v1012
      %v1021 = vmul.f32 %v985, %v1012
      %v1022 = vmul.f32 %v986, %v1012
      %v1023 = vmul.f32 %v987, %v1012
      %v1024 = vmul.f32 %v988, %v1012
      %v1025 = vmul.f32 %v989, %v1012
      %v1026 = vmul.f32 %v990, %v1012
      %v1027 = vmul.f32 %v991, %v1012
      %v1028 = vmul.f32 %v992, %v1012
      %v1029 = vmul.f32 %v993, %v1012
      %v1030 = vmul.f32 %v994, %v1012
      %v1031 = vmul.f32 %v995, %v1012
      %v1032 = vmul.f32 %v996, %v1012
      %v1033 = vmul.f32 %v997, %v1012
      %v1034 = vmul.f32 %v998, %v1012
      %v1035 = vmul.f32 %v999, %v1012
      %v1036 = vmul.f32 %v1000, %v1012
      %v1037 = vmul.f32 %v1001, %v1012
      %v1038 = vmul.f32 %v1002, %v1012
      %v1039 = vmul.f32 %v1003, %v1012
      %v1040 = vmul.f32 %v1004, %v1012
      %v1041 = vmul.f32 %v1005, %v1012
      %v1042 = vmul.f32 %v1006, %v1012
      %v1043 = vmul.f32 %v1007, %v1012
      %v1044 = vmul.f32 %v1008, %v1012
      %v1045 = vadd.f32 %v945, %v1013
      %v1046 = vadd.f32 %v946, %v1014
      %v1047 = vadd.f32 %v947, %v1015
      %v1048 = vadd.f32 %v948, %v1016
      %v1049 = vadd.f32 %v949, %v1017
      %v1050 = vadd.f32 %v950, %v1018
      %v1051 = vadd.f32 %v951, %v1019
      %v1052 = vadd.f32 %v952, %v1020
      %v1053 = vadd.f32 %v953, %v1021
      %v1054 = vadd.f32 %v954, %v1022
      %v1055 = vadd.f32 %v955, %v1023
      %v1056 = vadd.f32 %v956, %v1024
      %v1057 = vadd.f32 %v957, %v1025
      %v1058 = vadd.f32 %v958, %v1026
      %v1059 = vadd.f32 %v959, %v1027
      %v1060 = vadd.f32 %v960, %v1028
      %v1061 = vadd.f32 %v961, %v1029
      %v1062 = vadd.f32 %v962, %v1030
      %v1063 = vadd.f32 %v963, %v1031
      %v1064 = vadd.f32 %v964, %v1032
      %v1065 = vadd.f32 %v965, %v1033
      %v1066 = vadd.f32 %v966, %v1034
      %v1067 = vadd.f32 %v967, %v1035
      %v1068 = vadd.f32 %v968, %v1036
      %v1069 = vadd.f32 %v969, %v1037
      %v1070 = vadd.f32 %v970, %v1038
      %v1071 = vadd.f32 %v971, %v1039
      %v1072 = vadd.f32 %v972, %v1040
      %v1073 = vadd.f32 %v973, %v1041
      %v1074 = vadd.f32 %v974, %v1042
      %v1075 = vadd.f32 %v975, %v1043
      %v1076 = vadd.f32 %v976, %v1044
      %v1077 = vld [vmem:[%s641 + $0x8] sm:$0xff]
      %v1078 = vld [vmem:[%s641 + $0x10] sm:$0xff]
      %v1079 = vld [vmem:[%s641 + $0x28] sm:$0xff]
      %v1080 = vld [vmem:[%s641 + $0x30] sm:$0xff]
      %v1081 = vld [vmem:[%s641 + $0x48] sm:$0xff]
      %v1082 = vld [vmem:[%s641 + $0x50] sm:$0xff]
      %v1083 = vld [vmem:[%s641 + $0x68] sm:$0xff]
      %v1084 = vld [vmem:[%s641 + $0x70] sm:$0xff]
      %v1085 = vld [vmem:[%s641 + $0x88] sm:$0xff]
      %v1086 = vld [vmem:[%s641 + $0x90] sm:$0xff]
      %v1087 = vld [vmem:[%s641 + $0xa8] sm:$0xff]
      %v1088 = vld [vmem:[%s641 + $0xb0] sm:$0xff]
      %v1089 = vld [vmem:[%s641 + $0xc8] sm:$0xff]
      %v1090 = vld [vmem:[%s641 + $0xd0] sm:$0xff]
      %v1091 = vld [vmem:[%s641 + $0xe8] sm:$0xff]
      %v1092 = vld [vmem:[%s641 + $0xf0] sm:$0xff]
      %v1093 = vld [vmem:[%s641 + $0x108] sm:$0xff]
      %v1094 = vld [vmem:[%s641 + $0x110] sm:$0xff]
      %v1095 = vld [vmem:[%s641 + $0x128] sm:$0xff]
      %v1096 = vld [vmem:[%s641 + $0x130] sm:$0xff]
      %v1097 = vld [vmem:[%s641 + $0x148] sm:$0xff]
      %v1098 = vld [vmem:[%s641 + $0x150] sm:$0xff]
      %v1099 = vld [vmem:[%s641 + $0x168] sm:$0xff]
      %v1100 = vld [vmem:[%s641 + $0x170] sm:$0xff]
      %v1101 = vld [vmem:[%s641 + $0x188] sm:$0xff]
      %v1102 = vld [vmem:[%s641 + $0x190] sm:$0xff]
      %v1103 = vld [vmem:[%s641 + $0x1a8] sm:$0xff]
      %v1104 = vld [vmem:[%s641 + $0x1b0] sm:$0xff]
      %v1105 = vld [vmem:[%s641 + $0x1c8] sm:$0xff]
      %v1106 = vld [vmem:[%s641 + $0x1d0] sm:$0xff]
      %v1107 = vld [vmem:[%s641 + $0x1e8] sm:$0xff]
      %v1108 = vld [vmem:[%s641 + $0x1f0] sm:$0xff]
      %v1109 = vlaneseq
      %v1110 = vshrl.u32 %v1109, 7
      %v1111 = vsub.s32 1, %v1110
      %v1112 = vrot.slane %v675, %v1111
      %v1113 = vmul.f32 %v1077, %v1112
      %v1114 = vmul.f32 %v1078, %v1112
      %v1115 = vmul.f32 %v1079, %v1112
      %v1116 = vmul.f32 %v1080, %v1112
      %v1117 = vmul.f32 %v1081, %v1112
      %v1118 = vmul.f32 %v1082, %v1112
      %v1119 = vmul.f32 %v1083, %v1112
      %v1120 = vmul.f32 %v1084, %v1112
      %v1121 = vmul.f32 %v1085, %v1112
      %v1122 = vmul.f32 %v1086, %v1112
      %v1123 = vmul.f32 %v1087, %v1112
      %v1124 = vmul.f32 %v1088, %v1112
      %v1125 = vmul.f32 %v1089, %v1112
      %v1126 = vmul.f32 %v1090, %v1112
      %v1127 = vmul.f32 %v1091, %v1112
      %v1128 = vmul.f32 %v1092, %v1112
      %v1129 = vmul.f32 %v1093, %v1112
      %v1130 = vmul.f32 %v1094, %v1112
      %v1131 = vmul.f32 %v1095, %v1112
      %v1132 = vmul.f32 %v1096, %v1112
      %v1133 = vmul.f32 %v1097, %v1112
      %v1134 = vmul.f32 %v1098, %v1112
      %v1135 = vmul.f32 %v1099, %v1112
      %v1136 = vmul.f32 %v1100, %v1112
      %v1137 = vmul.f32 %v1101, %v1112
      %v1138 = vmul.f32 %v1102, %v1112
      %v1139 = vmul.f32 %v1103, %v1112
      %v1140 = vmul.f32 %v1104, %v1112
      %v1141 = vmul.f32 %v1105, %v1112
      %v1142 = vmul.f32 %v1106, %v1112
      %v1143 = vmul.f32 %v1107, %v1112
      %v1144 = vmul.f32 %v1108, %v1112
      %v1145 = vadd.f32 %v1045, %v1113
      %v1146 = vadd.f32 %v1046, %v1114
      %v1147 = vadd.f32 %v1047, %v1115
      %v1148 = vadd.f32 %v1048, %v1116
      %v1149 = vadd.f32 %v1049, %v1117
      %v1150 = vadd.f32 %v1050, %v1118
      %v1151 = vadd.f32 %v1051, %v1119
      %v1152 = vadd.f32 %v1052, %v1120
      %v1153 = vadd.f32 %v1053, %v1121
      %v1154 = vadd.f32 %v1054, %v1122
      %v1155 = vadd.f32 %v1055, %v1123
      %v1156 = vadd.f32 %v1056, %v1124
      %v1157 = vadd.f32 %v1057, %v1125
      %v1158 = vadd.f32 %v1058, %v1126
      %v1159 = vadd.f32 %v1059, %v1127
      %v1160 = vadd.f32 %v1060, %v1128
      %v1161 = vadd.f32 %v1061, %v1129
      %v1162 = vadd.f32 %v1062, %v1130
      %v1163 = vadd.f32 %v1063, %v1131
      %v1164 = vadd.f32 %v1064, %v1132
      %v1165 = vadd.f32 %v1065, %v1133
      %v1166 = vadd.f32 %v1066, %v1134
      %v1167 = vadd.f32 %v1067, %v1135
      %v1168 = vadd.f32 %v1068, %v1136
      %v1169 = vadd.f32 %v1069, %v1137
      %v1170 = vadd.f32 %v1070, %v1138
      %v1171 = vadd.f32 %v1071, %v1139
      %v1172 = vadd.f32 %v1072, %v1140
      %v1173 = vadd.f32 %v1073, %v1141
      %v1174 = vadd.f32 %v1074, %v1142
      %v1175 = vadd.f32 %v1075, %v1143
      %v1176 = vadd.f32 %v1076, %v1144
      %v1177 = vld [vmem:[%s641 + $0x9] sm:$0xff]
      %v1178 = vld [vmem:[%s641 + $0x11] sm:$0xff]
      %v1179 = vld [vmem:[%s641 + $0x29] sm:$0xff]
      %v1180 = vld [vmem:[%s641 + $0x31] sm:$0xff]
      %v1181 = vld [vmem:[%s641 + $0x49] sm:$0xff]
      %v1182 = vld [vmem:[%s641 + $0x51] sm:$0xff]
      %v1183 = vld [vmem:[%s641 + $0x69] sm:$0xff]
      %v1184 = vld [vmem:[%s641 + $0x71] sm:$0xff]
      %v1185 = vld [vmem:[%s641 + $0x89] sm:$0xff]
      %v1186 = vld [vmem:[%s641 + $0x91] sm:$0xff]
      %v1187 = vld [vmem:[%s641 + $0xa9] sm:$0xff]
      %v1188 = vld [vmem:[%s641 + $0xb1] sm:$0xff]
      %v1189 = vld [vmem:[%s641 + $0xc9] sm:$0xff]
      %v1190 = vld [vmem:[%s641 + $0xd1] sm:$0xff]
      %v1191 = vld [vmem:[%s641 + $0xe9] sm:$0xff]
      %v1192 = vld [vmem:[%s641 + $0xf1] sm:$0xff]
      %v1193 = vld [vmem:[%s641 + $0x109] sm:$0xff]
      %v1194 = vld [vmem:[%s641 + $0x111] sm:$0xff]
      %v1195 = vld [vmem:[%s641 + $0x129] sm:$0xff]
      %v1196 = vld [vmem:[%s641 + $0x131] sm:$0xff]
      %v1197 = vld [vmem:[%s641 + $0x149] sm:$0xff]
      %v1198 = vld [vmem:[%s641 + $0x151] sm:$0xff]
      %v1199 = vld [vmem:[%s641 + $0x169] sm:$0xff]
      %v1200 = vld [vmem:[%s641 + $0x171] sm:$0xff]
      %v1201 = vld [vmem:[%s641 + $0x189] sm:$0xff]
      %v1202 = vld [vmem:[%s641 + $0x191] sm:$0xff]
      %v1203 = vld [vmem:[%s641 + $0x1a9] sm:$0xff]
      %v1204 = vld [vmem:[%s641 + $0x1b1] sm:$0xff]
      %v1205 = vld [vmem:[%s641 + $0x1c9] sm:$0xff]
      %v1206 = vld [vmem:[%s641 + $0x1d1] sm:$0xff]
      %v1207 = vld [vmem:[%s641 + $0x1e9] sm:$0xff]
      %v1208 = vld [vmem:[%s641 + $0x1f1] sm:$0xff]
      %v1209 = vlaneseq
      %v1210 = vshrl.u32 %v1209, 7
      %v1211 = vsub.s32 2, %v1210
      %v1212 = vrot.slane %v675, %v1211
      %v1213 = vmul.f32 %v1177, %v1212
      %v1214 = vmul.f32 %v1178, %v1212
      %v1215 = vmul.f32 %v1179, %v1212
      %v1216 = vmul.f32 %v1180, %v1212
      %v1217 = vmul.f32 %v1181, %v1212
      %v1218 = vmul.f32 %v1182, %v1212
      %v1219 = vmul.f32 %v1183, %v1212
      %v1220 = vmul.f32 %v1184, %v1212
      %v1221 = vmul.f32 %v1185, %v1212
      %v1222 = vmul.f32 %v1186, %v1212
      %v1223 = vmul.f32 %v1187, %v1212
      %v1224 = vmul.f32 %v1188, %v1212
      %v1225 = vmul.f32 %v1189, %v1212
      %v1226 = vmul.f32 %v1190, %v1212
      %v1227 = vmul.f32 %v1191, %v1212
      %v1228 = vmul.f32 %v1192, %v1212
      %v1229 = vmul.f32 %v1193, %v1212
      %v1230 = vmul.f32 %v1194, %v1212
      %v1231 = vmul.f32 %v1195, %v1212
      %v1232 = vmul.f32 %v1196, %v1212
      %v1233 = vmul.f32 %v1197, %v1212
      %v1234 = vmul.f32 %v1198, %v1212
      %v1235 = vmul.f32 %v1199, %v1212
      %v1236 = vmul.f32 %v1200, %v1212
      %v1237 = vmul.f32 %v1201, %v1212
      %v1238 = vmul.f32 %v1202, %v1212
      %v1239 = vmul.f32 %v1203, %v1212
      %v1240 = vmul.f32 %v1204, %v1212
      %v1241 = vmul.f32 %v1205, %v1212
      %v1242 = vmul.f32 %v1206, %v1212
      %v1243 = vmul.f32 %v1207, %v1212
      %v1244 = vmul.f32 %v1208, %v1212
      %v1245 = vadd.f32 %v1145, %v1213
      %v1246 = vadd.f32 %v1146, %v1214
      %v1247 = vadd.f32 %v1147, %v1215
      %v1248 = vadd.f32 %v1148, %v1216
      %v1249 = vadd.f32 %v1149, %v1217
      %v1250 = vadd.f32 %v1150, %v1218
      %v1251 = vadd.f32 %v1151, %v1219
      %v1252 = vadd.f32 %v1152, %v1220
      %v1253 = vadd.f32 %v1153, %v1221
      %v1254 = vadd.f32 %v1154, %v1222
      %v1255 = vadd.f32 %v1155, %v1223
      %v1256 = vadd.f32 %v1156, %v1224
      %v1257 = vadd.f32 %v1157, %v1225
      %v1258 = vadd.f32 %v1158, %v1226
      %v1259 = vadd.f32 %v1159, %v1227
      %v1260 = vadd.f32 %v1160, %v1228
      %v1261 = vadd.f32 %v1161, %v1229
      %v1262 = vadd.f32 %v1162, %v1230
      %v1263 = vadd.f32 %v1163, %v1231
      %v1264 = vadd.f32 %v1164, %v1232
      %v1265 = vadd.f32 %v1165, %v1233
      %v1266 = vadd.f32 %v1166, %v1234
      %v1267 = vadd.f32 %v1167, %v1235
      %v1268 = vadd.f32 %v1168, %v1236
      %v1269 = vadd.f32 %v1169, %v1237
      %v1270 = vadd.f32 %v1170, %v1238
      %v1271 = vadd.f32 %v1171, %v1239
      %v1272 = vadd.f32 %v1172, %v1240
      %v1273 = vadd.f32 %v1173, %v1241
      %v1274 = vadd.f32 %v1174, %v1242
      %v1275 = vadd.f32 %v1175, %v1243
      %v1276 = vadd.f32 %v1176, %v1244
      %s1277 = scalar_lea.vmem [#allocation2], 64
      %v1278 = vld [vmem:[%s1277 + $0x7] sm:$0xff]
      %v1279 = vld [vmem:[%s1277 + $0xf] sm:$0xff]
      %v1280 = vld [vmem:[%s1277 + $0x27] sm:$0xff]
      %v1281 = vld [vmem:[%s1277 + $0x2f] sm:$0xff]
      %v1282 = vld [vmem:[%s1277 + $0x47] sm:$0xff]
      %v1283 = vld [vmem:[%s1277 + $0x4f] sm:$0xff]
      %v1284 = vld [vmem:[%s1277 + $0x67] sm:$0xff]
      %v1285 = vld [vmem:[%s1277 + $0x6f] sm:$0xff]
      %v1286 = vld [vmem:[%s1277 + $0x87] sm:$0xff]
      %v1287 = vld [vmem:[%s1277 + $0x8f] sm:$0xff]
      %v1288 = vld [vmem:[%s1277 + $0xa7] sm:$0xff]
      %v1289 = vld [vmem:[%s1277 + $0xaf] sm:$0xff]
      %v1290 = vld [vmem:[%s1277 + $0xc7] sm:$0xff]
      %v1291 = vld [vmem:[%s1277 + $0xcf] sm:$0xff]
      %v1292 = vld [vmem:[%s1277 + $0xe7] sm:$0xff]
      %v1293 = vld [vmem:[%s1277 + $0xef] sm:$0xff]
      %v1294 = vld [vmem:[%s1277 + $0x107] sm:$0xff]
      %v1295 = vld [vmem:[%s1277 + $0x10f] sm:$0xff]
      %v1296 = vld [vmem:[%s1277 + $0x127] sm:$0xff]
      %v1297 = vld [vmem:[%s1277 + $0x12f] sm:$0xff]
      %v1298 = vld [vmem:[%s1277 + $0x147] sm:$0xff]
      %v1299 = vld [vmem:[%s1277 + $0x14f] sm:$0xff]
      %v1300 = vld [vmem:[%s1277 + $0x167] sm:$0xff]
      %v1301 = vld [vmem:[%s1277 + $0x16f] sm:$0xff]
      %v1302 = vld [vmem:[%s1277 + $0x187] sm:$0xff]
      %v1303 = vld [vmem:[%s1277 + $0x18f] sm:$0xff]
      %v1304 = vld [vmem:[%s1277 + $0x1a7] sm:$0xff]
      %v1305 = vld [vmem:[%s1277 + $0x1af] sm:$0xff]
      %v1306 = vld [vmem:[%s1277 + $0x1c7] sm:$0xff]
      %v1307 = vld [vmem:[%s1277 + $0x1cf] sm:$0xff]
      %v1308 = vld [vmem:[%s1277 + $0x1e7] sm:$0xff]
      %v1309 = vld [vmem:[%s1277 + $0x1ef] sm:$0xff]
      %v1310 = vlaneseq
      %v1311 = vshrl.u32 %v1310, 7
      %v1312 = vsub.s32 0, %v1311
      %v1313 = vrot.slane %v676, %v1312
      %v1314 = vmul.f32 %v1278, %v1313
      %v1315 = vmul.f32 %v1279, %v1313
      %v1316 = vmul.f32 %v1280, %v1313
      %v1317 = vmul.f32 %v1281, %v1313
      %v1318 = vmul.f32 %v1282, %v1313
      %v1319 = vmul.f32 %v1283, %v1313
      %v1320 = vmul.f32 %v1284, %v1313
      %v1321 = vmul.f32 %v1285, %v1313
      %v1322 = vmul.f32 %v1286, %v1313
      %v1323 = vmul.f32 %v1287, %v1313
      %v1324 = vmul.f32 %v1288, %v1313
      %v1325 = vmul.f32 %v1289, %v1313
      %v1326 = vmul.f32 %v1290, %v1313
      %v1327 = vmul.f32 %v1291, %v1313
      %v1328 = vmul.f32 %v1292, %v1313
      %v1329 = vmul.f32 %v1293, %v1313
      %v1330 = vmul.f32 %v1294, %v1313
      %v1331 = vmul.f32 %v1295, %v1313
      %v1332 = vmul.f32 %v1296, %v1313
      %v1333 = vmul.f32 %v1297, %v1313
      %v1334 = vmul.f32 %v1298, %v1313
      %v1335 = vmul.f32 %v1299, %v1313
      %v1336 = vmul.f32 %v1300, %v1313
      %v1337 = vmul.f32 %v1301, %v1313
      %v1338 = vmul.f32 %v1302, %v1313
      %v1339 = vmul.f32 %v1303, %v1313
      %v1340 = vmul.f32 %v1304, %v1313
      %v1341 = vmul.f32 %v1305, %v1313
      %v1342 = vmul.f32 %v1306, %v1313
      %v1343 = vmul.f32 %v1307, %v1313
      %v1344 = vmul.f32 %v1308, %v1313
      %v1345 = vmul.f32 %v1309, %v1313
      %v1346 = vadd.f32 %v1245, %v1314
      %v1347 = vadd.f32 %v1246, %v1315
      %v1348 = vadd.f32 %v1247, %v1316
      %v1349 = vadd.f32 %v1248, %v1317
      %v1350 = vadd.f32 %v1249, %v1318
      %v1351 = vadd.f32 %v1250, %v1319
      %v1352 = vadd.f32 %v1251, %v1320
      %v1353 = vadd.f32 %v1252, %v1321
      %v1354 = vadd.f32 %v1253, %v1322
      %v1355 = vadd.f32 %v1254, %v1323
      %v1356 = vadd.f32 %v1255, %v1324
      %v1357 = vadd.f32 %v1256, %v1325
      %v1358 = vadd.f32 %v1257, %v1326
      %v1359 = vadd.f32 %v1258, %v1327
      %v1360 = vadd.f32 %v1259, %v1328
      %v1361 = vadd.f32 %v1260, %v1329
      %v1362 = vadd.f32 %v1261, %v1330
      %v1363 = vadd.f32 %v1262, %v1331
      %v1364 = vadd.f32 %v1263, %v1332
      %v1365 = vadd.f32 %v1264, %v1333
      %v1366 = vadd.f32 %v1265, %v1334
      %v1367 = vadd.f32 %v1266, %v1335
      %v1368 = vadd.f32 %v1267, %v1336
      %v1369 = vadd.f32 %v1268, %v1337
      %v1370 = vadd.f32 %v1269, %v1338
      %v1371 = vadd.f32 %v1270, %v1339
      %v1372 = vadd.f32 %v1271, %v1340
      %v1373 = vadd.f32 %v1272, %v1341
      %v1374 = vadd.f32 %v1273, %v1342
      %v1375 = vadd.f32 %v1274, %v1343
      %v1376 = vadd.f32 %v1275, %v1344
      %v1377 = vadd.f32 %v1276, %v1345
      %v1378 = vld [vmem:[%s1277 + $0x8] sm:$0xff]
      %v1379 = vld [vmem:[%s1277 + $0x10] sm:$0xff]
      %v1380 = vld [vmem:[%s1277 + $0x28] sm:$0xff]
      %v1381 = vld [vmem:[%s1277 + $0x30] sm:$0xff]
      %v1382 = vld [vmem:[%s1277 + $0x48] sm:$0xff]
      %v1383 = vld [vmem:[%s1277 + $0x50] sm:$0xff]
      %v1384 = vld [vmem:[%s1277 + $0x68] sm:$0xff]
      %v1385 = vld [vmem:[%s1277 + $0x70] sm:$0xff]
      %v1386 = vld [vmem:[%s1277 + $0x88] sm:$0xff]
      %v1387 = vld [vmem:[%s1277 + $0x90] sm:$0xff]
      %v1388 = vld [vmem:[%s1277 + $0xa8] sm:$0xff]
      %v1389 = vld [vmem:[%s1277 + $0xb0] sm:$0xff]
      %v1390 = vld [vmem:[%s1277 + $0xc8] sm:$0xff]
      %v1391 = vld [vmem:[%s1277 + $0xd0] sm:$0xff]
      %v1392 = vld [vmem:[%s1277 + $0xe8] sm:$0xff]
      %v1393 = vld [vmem:[%s1277 + $0xf0] sm:$0xff]
      %v1394 = vld [vmem:[%s1277 + $0x108] sm:$0xff]
      %v1395 = vld [vmem:[%s1277 + $0x110] sm:$0xff]
      %v1396 = vld [vmem:[%s1277 + $0x128] sm:$0xff]
      %v1397 = vld [vmem:[%s1277 + $0x130] sm:$0xff]
      %v1398 = vld [vmem:[%s1277 + $0x148] sm:$0xff]
      %v1399 = vld [vmem:[%s1277 + $0x150] sm:$0xff]
      %v1400 = vld [vmem:[%s1277 + $0x168] sm:$0xff]
      %v1401 = vld [vmem:[%s1277 + $0x170] sm:$0xff]
      %v1402 = vld [vmem:[%s1277 + $0x188] sm:$0xff]
      %v1403 = vld [vmem:[%s1277 + $0x190] sm:$0xff]
      %v1404 = vld [vmem:[%s1277 + $0x1a8] sm:$0xff]
      %v1405 = vld [vmem:[%s1277 + $0x1b0] sm:$0xff]
      %v1406 = vld [vmem:[%s1277 + $0x1c8] sm:$0xff]
      %v1407 = vld [vmem:[%s1277 + $0x1d0] sm:$0xff]
      %v1408 = vld [vmem:[%s1277 + $0x1e8] sm:$0xff]
      %v1409 = vld [vmem:[%s1277 + $0x1f0] sm:$0xff]
      %v1410 = vlaneseq
      %v1411 = vshrl.u32 %v1410, 7
      %v1412 = vsub.s32 1, %v1411
      %v1413 = vrot.slane %v676, %v1412
      %v1414 = vmul.f32 %v1378, %v1413
      %v1415 = vmul.f32 %v1379, %v1413
      %v1416 = vmul.f32 %v1380, %v1413
      %v1417 = vmul.f32 %v1381, %v1413
      %v1418 = vmul.f32 %v1382, %v1413
      %v1419 = vmul.f32 %v1383, %v1413
      %v1420 = vmul.f32 %v1384, %v1413
      %v1421 = vmul.f32 %v1385, %v1413
      %v1422 = vmul.f32 %v1386, %v1413
      %v1423 = vmul.f32 %v1387, %v1413
      %v1424 = vmul.f32 %v1388, %v1413
      %v1425 = vmul.f32 %v1389, %v1413
      %v1426 = vmul.f32 %v1390, %v1413
      %v1427 = vmul.f32 %v1391, %v1413
      %v1428 = vmul.f32 %v1392, %v1413
      %v1429 = vmul.f32 %v1393, %v1413
      %v1430 = vmul.f32 %v1394, %v1413
      %v1431 = vmul.f32 %v1395, %v1413
      %v1432 = vmul.f32 %v1396, %v1413
      %v1433 = vmul.f32 %v1397, %v1413
      %v1434 = vmul.f32 %v1398, %v1413
      %v1435 = vmul.f32 %v1399, %v1413
      %v1436 = vmul.f32 %v1400, %v1413
      %v1437 = vmul.f32 %v1401, %v1413
      %v1438 = vmul.f32 %v1402, %v1413
      %v1439 = vmul.f32 %v1403, %v1413
      %v1440 = vmul.f32 %v1404, %v1413
      %v1441 = vmul.f32 %v1405, %v1413
      %v1442 = vmul.f32 %v1406, %v1413
      %v1443 = vmul.f32 %v1407, %v1413
      %v1444 = vmul.f32 %v1408, %v1413
      %v1445 = vmul.f32 %v1409, %v1413
      %v1446 = vadd.f32 %v1346, %v1414
      %v1447 = vadd.f32 %v1347, %v1415
      %v1448 = vadd.f32 %v1348, %v1416
      %v1449 = vadd.f32 %v1349, %v1417
      %v1450 = vadd.f32 %v1350, %v1418
      %v1451 = vadd.f32 %v1351, %v1419
      %v1452 = vadd.f32 %v1352, %v1420
      %v1453 = vadd.f32 %v1353, %v1421
      %v1454 = vadd.f32 %v1354, %v1422
      %v1455 = vadd.f32 %v1355, %v1423
      %v1456 = vadd.f32 %v1356, %v1424
      %v1457 = vadd.f32 %v1357, %v1425
      %v1458 = vadd.f32 %v1358, %v1426
      %v1459 = vadd.f32 %v1359, %v1427
      %v1460 = vadd.f32 %v1360, %v1428
      %v1461 = vadd.f32 %v1361, %v1429
      %v1462 = vadd.f32 %v1362, %v1430
      %v1463 = vadd.f32 %v1363, %v1431
      %v1464 = vadd.f32 %v1364, %v1432
      %v1465 = vadd.f32 %v1365, %v1433
      %v1466 = vadd.f32 %v1366, %v1434
      %v1467 = vadd.f32 %v1367, %v1435
      %v1468 = vadd.f32 %v1368, %v1436
      %v1469 = vadd.f32 %v1369, %v1437
      %v1470 = vadd.f32 %v1370, %v1438
      %v1471 = vadd.f32 %v1371, %v1439
      %v1472 = vadd.f32 %v1372, %v1440
      %v1473 = vadd.f32 %v1373, %v1441
      %v1474 = vadd.f32 %v1374, %v1442
      %v1475 = vadd.f32 %v1375, %v1443
      %v1476 = vadd.f32 %v1376, %v1444
      %v1477 = vadd.f32 %v1377, %v1445
      %v1478 = vld [vmem:[%s1277 + $0x9] sm:$0xff]
      %v1479 = vld [vmem:[%s1277 + $0x11] sm:$0xff]
      %v1480 = vld [vmem:[%s1277 + $0x29] sm:$0xff]
      %v1481 = vld [vmem:[%s1277 + $0x31] sm:$0xff]
      %v1482 = vld [vmem:[%s1277 + $0x49] sm:$0xff]
      %v1483 = vld [vmem:[%s1277 + $0x51] sm:$0xff]
      %v1484 = vld [vmem:[%s1277 + $0x69] sm:$0xff]
      %v1485 = vld [vmem:[%s1277 + $0x71] sm:$0xff]
      %v1486 = vld [vmem:[%s1277 + $0x89] sm:$0xff]
      %v1487 = vld [vmem:[%s1277 + $0x91] sm:$0xff]
      %v1488 = vld [vmem:[%s1277 + $0xa9] sm:$0xff]
      %v1489 = vld [vmem:[%s1277 + $0xb1] sm:$0xff]
      %v1490 = vld [vmem:[%s1277 + $0xc9] sm:$0xff]
      %v1491 = vld [vmem:[%s1277 + $0xd1] sm:$0xff]
      %v1492 = vld [vmem:[%s1277 + $0xe9] sm:$0xff]
      %v1493 = vld [vmem:[%s1277 + $0xf1] sm:$0xff]
      %v1494 = vld [vmem:[%s1277 + $0x109] sm:$0xff]
      %v1495 = vld [vmem:[%s1277 + $0x111] sm:$0xff]
      %v1496 = vld [vmem:[%s1277 + $0x129] sm:$0xff]
      %v1497 = vld [vmem:[%s1277 + $0x131] sm:$0xff]
      %v1498 = vld [vmem:[%s1277 + $0x149] sm:$0xff]
      %v1499 = vld [vmem:[%s1277 + $0x151] sm:$0xff]
      %v1500 = vld [vmem:[%s1277 + $0x169] sm:$0xff]
      %v1501 = vld [vmem:[%s1277 + $0x171] sm:$0xff]
      %v1502 = vld [vmem:[%s1277 + $0x189] sm:$0xff]
      %v1503 = vld [vmem:[%s1277 + $0x191] sm:$0xff]
      %v1504 = vld [vmem:[%s1277 + $0x1a9] sm:$0xff]
      %v1505 = vld [vmem:[%s1277 + $0x1b1] sm:$0xff]
      %v1506 = vld [vmem:[%s1277 + $0x1c9] sm:$0xff]
      %v1507 = vld [vmem:[%s1277 + $0x1d1] sm:$0xff]
      %v1508 = vld [vmem:[%s1277 + $0x1e9] sm:$0xff]
      %v1509 = vld [vmem:[%s1277 + $0x1f1] sm:$0xff]
      %v1510 = vlaneseq
      %v1511 = vshrl.u32 %v1510, 7
      %v1512 = vsub.s32 2, %v1511
      %v1513 = vrot.slane %v676, %v1512
      %v1514 = vmul.f32 %v1478, %v1513
      %v1515 = vmul.f32 %v1479, %v1513
      %v1516 = vmul.f32 %v1480, %v1513
      %v1517 = vmul.f32 %v1481, %v1513
      %v1518 = vmul.f32 %v1482, %v1513
      %v1519 = vmul.f32 %v1483, %v1513
      %v1520 = vmul.f32 %v1484, %v1513
      %v1521 = vmul.f32 %v1485, %v1513
      %v1522 = vmul.f32 %v1486, %v1513
      %v1523 = vmul.f32 %v1487, %v1513
      %v1524 = vmul.f32 %v1488, %v1513
      %v1525 = vmul.f32 %v1489, %v1513
      %v1526 = vmul.f32 %v1490, %v1513
      %v1527 = vmul.f32 %v1491, %v1513
      %v1528 = vmul.f32 %v1492, %v1513
      %v1529 = vmul.f32 %v1493, %v1513
      %v1530 = vmul.f32 %v1494, %v1513
      %v1531 = vmul.f32 %v1495, %v1513
      %v1532 = vmul.f32 %v1496, %v1513
      %v1533 = vmul.f32 %v1497, %v1513
      %v1534 = vmul.f32 %v1498, %v1513
      %v1535 = vmul.f32 %v1499, %v1513
      %v1536 = vmul.f32 %v1500, %v1513
      %v1537 = vmul.f32 %v1501, %v1513
      %v1538 = vmul.f32 %v1502, %v1513
      %v1539 = vmul.f32 %v1503, %v1513
      %v1540 = vmul.f32 %v1504, %v1513
      %v1541 = vmul.f32 %v1505, %v1513
      %v1542 = vmul.f32 %v1506, %v1513
      %v1543 = vmul.f32 %v1507, %v1513
      %v1544 = vmul.f32 %v1508, %v1513
      %v1545 = vmul.f32 %v1509, %v1513
      %v1546 = vadd.f32 %v1446, %v1514
      %v1547 = vadd.f32 %v1447, %v1515
      %v1548 = vadd.f32 %v1448, %v1516
      %v1549 = vadd.f32 %v1449, %v1517
      %v1550 = vadd.f32 %v1450, %v1518
      %v1551 = vadd.f32 %v1451, %v1519
      %v1552 = vadd.f32 %v1452, %v1520
      %v1553 = vadd.f32 %v1453, %v1521
      %v1554 = vadd.f32 %v1454, %v1522
      %v1555 = vadd.f32 %v1455, %v1523
      %v1556 = vadd.f32 %v1456, %v1524
      %v1557 = vadd.f32 %v1457, %v1525
      %v1558 = vadd.f32 %v1458, %v1526
      %v1559 = vadd.f32 %v1459, %v1527
      %v1560 = vadd.f32 %v1460, %v1528
      %v1561 = vadd.f32 %v1461, %v1529
      %v1562 = vadd.f32 %v1462, %v1530
      %v1563 = vadd.f32 %v1463, %v1531
      %v1564 = vadd.f32 %v1464, %v1532
      %v1565 = vadd.f32 %v1465, %v1533
      %v1566 = vadd.f32 %v1466, %v1534
      %v1567 = vadd.f32 %v1467, %v1535
      %v1568 = vadd.f32 %v1468, %v1536
      %v1569 = vadd.f32 %v1469, %v1537
      %v1570 = vadd.f32 %v1470, %v1538
      %v1571 = vadd.f32 %v1471, %v1539
      %v1572 = vadd.f32 %v1472, %v1540
      %v1573 = vadd.f32 %v1473, %v1541
      %v1574 = vadd.f32 %v1474, %v1542
      %v1575 = vadd.f32 %v1475, %v1543
      %v1576 = vadd.f32 %v1476, %v1544
      %v1577 = vadd.f32 %v1477, %v1545
      %v1578 = vpack.c.bf16 %v1547, %v1546
      %v1579 = vpack.c.bf16 %v1549, %v1548
      %v1580 = vpack.c.bf16 %v1551, %v1550
      %v1581 = vpack.c.bf16 %v1553, %v1552
      %v1582 = vpack.c.bf16 %v1555, %v1554
      %v1583 = vpack.c.bf16 %v1557, %v1556
      %v1584 = vpack.c.bf16 %v1559, %v1558
      %v1585 = vpack.c.bf16 %v1561, %v1560
      %v1586 = vpack.c.bf16 %v1563, %v1562
      %v1587 = vpack.c.bf16 %v1565, %v1564
      %v1588 = vpack.c.bf16 %v1567, %v1566
      %v1589 = vpack.c.bf16 %v1569, %v1568
      %v1590 = vpack.c.bf16 %v1571, %v1570
      %v1591 = vpack.c.bf16 %v1573, %v1572
      %v1592 = vpack.c.bf16 %v1575, %v1574
      %v1593 = vpack.c.bf16 %v1577, %v1576
      %v1594 = vld [vmem:[%s4] sm:$0x1]
      %v1595 = vld [vmem:[%s5] sm:$0x1]
      %v1597 = vlaneseq
      %v1598 = vshrl.u32 %v1597, 7
      %v1599 = vsub.s32 0, %v1598
      %v1600 = vrot.slane %v1595, %v1599
      %v1603 = vsel %vm253, %v1578, 0
      %v1606 = vsel %vm253, %v1579, 0
      %v1609 = vsel %vm253, %v1580, 0
      %v1612 = vsel %vm253, %v1581, 0
      %v1615 = vsel %vm253, %v1582, 0
      %v1618 = vsel %vm253, %v1583, 0
      %v1621 = vsel %vm253, %v1584, 0
      %v1624 = vsel %vm253, %v1585, 0
      %v1627 = vsel %vm253, %v1586, 0
      %v1630 = vsel %vm253, %v1587, 0
      %v1633 = vsel %vm253, %v1588, 0
      %v1636 = vsel %vm253, %v1589, 0
      %v1639 = vsel %vm253, %v1590, 0
      %v1642 = vsel %vm253, %v1591, 0
      %v1645 = vsel %vm253, %v1592, 0
      %v1648 = vsel %vm253, %v1593, 0
      %v1651 = vsel %vm444, %v1594, 0
      %1653 = vmatprep.subr.bf16.mxu0 0
      %1654 = vmatpush1.bf16.msra.mxu0 %v1651
      %1655 = vmatprep.subr.bf16.mxu0 0
      %1656 = vmatpush1.bf16.msra.mxu0 0
      %1657 = vmatprep.subr.bf16.mxu0 0
      %1658 = vmatpush1.bf16.msra.mxu0 0
      %1659 = vmatprep.subr.bf16.mxu0 0
      %1660 = vmatpush1.bf16.msra.mxu0 0
      %1661 = vmatprep.subr.bf16.mxu0 0
      %1662 = vmatpush1.bf16.msra.mxu0 0
      %1663 = vmatprep.subr.bf16.mxu0 0
      %1664 = vmatpush1.bf16.msra.mxu0 0
      %1665 = vmatprep.subr.bf16.mxu0 0
      %1666 = vmatpush1.bf16.msra.mxu0 0
      %1667 = vmatprep.subr.bf16.mxu0 0
      %1668 = vmatpush1.bf16.msra.mxu0 0
      %1669 = vmatprep.subr.bf16.mxu0 0
      %1670 = vmatpush1.bf16.msra.mxu0 0
      %1671 = vmatprep.subr.bf16.mxu0 0
      %1672 = vmatpush1.bf16.msra.mxu0 0
      %1673 = vmatprep.subr.bf16.mxu0 0
      %1674 = vmatpush1.bf16.msra.mxu0 0
      %1675 = vmatprep.subr.bf16.mxu0 0
      %1676 = vmatpush1.bf16.msra.mxu0 0
      %1677 = vmatprep.subr.bf16.mxu0 0
      %1678 = vmatpush1.bf16.msra.mxu0 0
      %1679 = vmatprep.subr.bf16.mxu0 0
      %1680 = vmatpush1.bf16.msra.mxu0 0
      %1681 = vmatprep.subr.bf16.mxu0 0
      %1682 = vmatpush1.bf16.msra.mxu0 0
      %1683 = vmatprep.subr.bf16.mxu0 0
      %1684 = vmatpush1.bf16.msra.mxu0 0
      %1685 = vmatprep.mubr.bf16.mxu0 0
      %1686 = vmatmul.mubr.bf16.gmra.mrb[0].mxu0 %v1603
      %v1687 = vpop.f32.mrb[0].mxu0
      %v1688 = vadd.f32 %v1600, %v1687
      %v1689 = vpop.f32.mrb[0].mxu0
      %v1690 = vpop.f32.mrb[0].mxu0
      %v1691 = vadd.f32 %v1600, %v1690
      %v1692 = vpop.f32.mrb[0].mxu0
      %1693 = vmatprep.mubr.bf16.mxu0 0
      %1694 = vmatmul.mubr.bf16.gmra.mrb[0].mxu0 %v1606
      %v1695 = vpop.f32.mrb[0].mxu0
      %v1696 = vadd.f32 %v1600, %v1695
      %v1697 = vpop.f32.mrb[0].mxu0
      %v1698 = vpop.f32.mrb[0].mxu0
      %v1699 = vadd.f32 %v1600, %v1698
      %v1700 = vpop.f32.mrb[0].mxu0
      %1701 = vmatprep.mubr.bf16.mxu0 0
      %1702 = vmatmul.mubr.bf16.gmra.mrb[0].mxu0 %v1609
      %v1703 = vpop.f32.mrb[0].mxu0
      %v1704 = vadd.f32 %v1600, %v1703
      %v1705 = vpop.f32.mrb[0].mxu0
      %v1706 = vpop.f32.mrb[0].mxu0
      %v1707 = vadd.f32 %v1600, %v1706
      %v1708 = vpop.f32.mrb[0].mxu0
      %1709 = vmatprep.mubr.bf16.mxu0 0
      %1710 = vmatmul.mubr.bf16.gmra.mrb[0].mxu0 %v1612
      %v1711 = vpop.f32.mrb[0].mxu0
      %v1712 = vadd.f32 %v1600, %v1711
      %v1713 = vpop.f32.mrb[0].mxu0
      %v1714 = vpop.f32.mrb[0].mxu0
      %v1715 = vadd.f32 %v1600, %v1714
      %v1716 = vpop.f32.mrb[0].mxu0
      %1717 = vmatprep.mubr.bf16.mxu0 0
      %1718 = vmatmul.mubr.bf16.gmra.mrb[0].mxu0 %v1615
      %v1719 = vpop.f32.mrb[0].mxu0
      %v1720 = vadd.f32 %v1600, %v1719
      %v1721 = vpop.f32.mrb[0].mxu0
      %v1722 = vpop.f32.mrb[0].mxu0
      %v1723 = vadd.f32 %v1600, %v1722
      %v1724 = vpop.f32.mrb[0].mxu0
      %1725 = vmatprep.mubr.bf16.mxu0 0
      %1726 = vmatmul.mubr.bf16.gmra.mrb[0].mxu0 %v1618
      %v1727 = vpop.f32.mrb[0].mxu0
      %v1728 = vadd.f32 %v1600, %v1727
      %v1729 = vpop.f32.mrb[0].mxu0
      %v1730 = vpop.f32.mrb[0].mxu0
      %v1731 = vadd.f32 %v1600, %v1730
      %v1732 = vpop.f32.mrb[0].mxu0
      %1733 = vmatprep.mubr.bf16.mxu0 0
      %1734 = vmatmul.mubr.bf16.gmra.mrb[0].mxu0 %v1621
      %v1735 = vpop.f32.mrb[0].mxu0
      %v1736 = vadd.f32 %v1600, %v1735
      %v1737 = vpop.f32.mrb[0].mxu0
      %v1738 = vpop.f32.mrb[0].mxu0
      %v1739 = vadd.f32 %v1600, %v1738
      %v1740 = vpop.f32.mrb[0].mxu0
      %1741 = vmatprep.mubr.bf16.mxu0 0
      %1742 = vmatmul.mubr.bf16.gmra.mrb[0].mxu0 %v1624
      %v1743 = vpop.f32.mrb[0].mxu0
      %v1744 = vadd.f32 %v1600, %v1743
      %v1745 = vpop.f32.mrb[0].mxu0
      %v1746 = vpop.f32.mrb[0].mxu0
      %v1747 = vadd.f32 %v1600, %v1746
      %v1748 = vpop.f32.mrb[0].mxu0
      %1749 = vmatprep.mubr.bf16.mxu0 0
      %1750 = vmatmul.mubr.bf16.gmra.mrb[0].mxu0 %v1627
      %v1751 = vpop.f32.mrb[0].mxu0
      %v1752 = vadd.f32 %v1600, %v1751
      %v1753 = vpop.f32.mrb[0].mxu0
      %v1754 = vpop.f32.mrb[0].mxu0
      %v1755 = vadd.f32 %v1600, %v1754
      %v1756 = vpop.f32.mrb[0].mxu0
      %1757 = vmatprep.mubr.bf16.mxu0 0
      %1758 = vmatmul.mubr.bf16.gmra.mrb[0].mxu0 %v1630
      %v1759 = vpop.f32.mrb[0].mxu0
      %v1760 = vadd.f32 %v1600, %v1759
      %v1761 = vpop.f32.mrb[0].mxu0
      %v1762 = vpop.f32.mrb[0].mxu0
      %v1763 = vadd.f32 %v1600, %v1762
      %v1764 = vpop.f32.mrb[0].mxu0
      %1765 = vmatprep.mubr.bf16.mxu0 0
      %1766 = vmatmul.mubr.bf16.gmra.mrb[0].mxu0 %v1633
      %v1767 = vpop.f32.mrb[0].mxu0
      %v1768 = vadd.f32 %v1600, %v1767
      %v1769 = vpop.f32.mrb[0].mxu0
      %v1770 = vpop.f32.mrb[0].mxu0
      %v1771 = vadd.f32 %v1600, %v1770
      %v1772 = vpop.f32.mrb[0].mxu0
      %1773 = vmatprep.mubr.bf16.mxu0 0
      %1774 = vmatmul.mubr.bf16.gmra.mrb[0].mxu0 %v1636
      %v1775 = vpop.f32.mrb[0].mxu0
      %v1776 = vadd.f32 %v1600, %v1775
      %v1777 = vpop.f32.mrb[0].mxu0
      %v1778 = vpop.f32.mrb[0].mxu0
      %v1779 = vadd.f32 %v1600, %v1778
      %v1780 = vpop.f32.mrb[0].mxu0
      %1781 = vmatprep.mubr.bf16.mxu0 0
      %1782 = vmatmul.mubr.bf16.gmra.mrb[0].mxu0 %v1639
      %v1783 = vpop.f32.mrb[0].mxu0
      %v1784 = vadd.f32 %v1600, %v1783
      %v1785 = vpop.f32.mrb[0].mxu0
      %v1786 = vpop.f32.mrb[0].mxu0
      %v1787 = vadd.f32 %v1600, %v1786
      %v1788 = vpop.f32.mrb[0].mxu0
      %1789 = vmatprep.mubr.bf16.mxu0 0
      %1790 = vmatmul.mubr.bf16.gmra.mrb[0].mxu0 %v1642
      %v1791 = vpop.f32.mrb[0].mxu0
      %v1792 = vadd.f32 %v1600, %v1791
      %v1793 = vpop.f32.mrb[0].mxu0
      %v1794 = vpop.f32.mrb[0].mxu0
      %v1795 = vadd.f32 %v1600, %v1794
      %v1796 = vpop.f32.mrb[0].mxu0
      %1797 = vmatprep.mubr.bf16.mxu0 0
      %1798 = vmatmul.mubr.bf16.gmra.mrb[0].mxu0 %v1645
      %v1799 = vpop.f32.mrb[0].mxu0
      %v1800 = vadd.f32 %v1600, %v1799
      %v1801 = vpop.f32.mrb[0].mxu0
      %v1802 = vpop.f32.mrb[0].mxu0
      %v1803 = vadd.f32 %v1600, %v1802
      %v1804 = vpop.f32.mrb[0].mxu0
      %1805 = vmatprep.mubr.bf16.mxu0 0
      %1806 = vmatmul.mubr.bf16.gmra.mrb[0].mxu0 %v1648
      %v1807 = vpop.f32.mrb[0].mxu0
      %v1808 = vadd.f32 %v1600, %v1807
      %v1809 = vpop.f32.mrb[0].mxu0
      %v1810 = vpop.f32.mrb[0].mxu0
      %v1811 = vadd.f32 %v1600, %v1810
      %v1812 = vpop.f32.mrb[0].mxu0
      %1813 = vdwg.mxu0
      %v1814 = vmax.f32 %v1688, 0.0
      %v1815 = vmax.f32 %v1691, 0.0
      %v1816 = vmax.f32 %v1696, 0.0
      %v1817 = vmax.f32 %v1699, 0.0
      %v1818 = vmax.f32 %v1704, 0.0
      %v1819 = vmax.f32 %v1707, 0.0
      %v1820 = vmax.f32 %v1712, 0.0
      %v1821 = vmax.f32 %v1715, 0.0
      %v1822 = vmax.f32 %v1720, 0.0
      %v1823 = vmax.f32 %v1723, 0.0
      %v1824 = vmax.f32 %v1728, 0.0
      %v1825 = vmax.f32 %v1731, 0.0
      %v1826 = vmax.f32 %v1736, 0.0
      %v1827 = vmax.f32 %v1739, 0.0
      %v1828 = vmax.f32 %v1744, 0.0
      %v1829 = vmax.f32 %v1747, 0.0
      %v1830 = vmax.f32 %v1752, 0.0
      %v1831 = vmax.f32 %v1755, 0.0
      %v1832 = vmax.f32 %v1760, 0.0
      %v1833 = vmax.f32 %v1763, 0.0
      %v1834 = vmax.f32 %v1768, 0.0
      %v1835 = vmax.f32 %v1771, 0.0
      %v1836 = vmax.f32 %v1776, 0.0
      %v1837 = vmax.f32 %v1779, 0.0
      %v1838 = vmax.f32 %v1784, 0.0
      %v1839 = vmax.f32 %v1787, 0.0
      %v1840 = vmax.f32 %v1792, 0.0
      %v1841 = vmax.f32 %v1795, 0.0
      %v1842 = vmax.f32 %v1800, 0.0
      %v1843 = vmax.f32 %v1803, 0.0
      %v1844 = vmax.f32 %v1808, 0.0
      %v1845 = vmax.f32 %v1811, 0.0
      %v1848 = vunpack.c.l.s4 1983009808
      %v1849 = vunpack.c.0.s8 %v1848
      %v1850 = vlaneseq
      %v1851 = vshrl.u32 %v1850, 7
      %v1852 = vsub.s32 %v1849, %v1851
      %v1853 = vrot.slane %v300, %v1852
      %1855 = vst [vmem:[%s251] sm:$0xf] %v1853
      %1856 = vxpose.xlu0.b32.start [1/16] %v1814, 128
      %1857 = vxpose.xlu0.b32.cont [2/16] %v1815, 128
      %1858 = vxpose.xlu0.b32.cont [3/16] %v1816, 128
      %1859 = vxpose.xlu0.b32.cont [4/16] %v1817, 128
      %1860 = vxpose.xlu0.b32.cont [5/16] %v1818, 128
      %1861 = vxpose.xlu0.b32.cont [6/16] %v1819, 128
      %1862 = vxpose.xlu0.b32.cont [7/16] %v1820, 128
      %1863 = vxpose.xlu0.b32.cont [8/16] %v1821, 128
      %1864 = vxpose.xlu0.b32.cont [9/16] %v1822, 128
      %1865 = vxpose.xlu0.b32.cont [10/16] %v1823, 128
      %1866 = vxpose.xlu0.b32.cont [11/16] %v1824, 128
      %1867 = vxpose.xlu0.b32.cont [12/16] %v1825, 128
      %1868 = vxpose.xlu0.b32.cont [13/16] %v1826, 128
      %1869 = vxpose.xlu0.b32.cont [14/16] %v1827, 128
      %1870 = vxpose.xlu0.b32.cont [15/16] %v1828, 128
      %1871 = vxpose.xlu0.b32.end [16/16] %v1829, 128
      %v1872 = vpop.trf.xlu0
      %v1873 = vpop.trf.xlu0
      %v1874 = vpop.trf.xlu0
      %v1875 = vpop.trf.xlu0
      %v1876 = vpop.trf.xlu0
      %v1877 = vpop.trf.xlu0
      %v1878 = vpop.trf.xlu0
      %v1879 = vpop.trf.xlu0
      %v1880 = vpop.trf.xlu0
      %v1881 = vpop.trf.xlu0
      %v1882 = vpop.trf.xlu0
      %v1883 = vpop.trf.xlu0
      %v1884 = vpop.trf.xlu0
      %v1885 = vpop.trf.xlu0
      %v1886 = vpop.trf.xlu0
      %v1887 = vpop.trf.xlu0
      %1888 = vxpose.xlu0.b32.start [1/16] %v1830, 128
      %1889 = vxpose.xlu0.b32.cont [2/16] %v1831, 128
      %1890 = vxpose.xlu0.b32.cont [3/16] %v1832, 128
      %1891 = vxpose.xlu0.b32.cont [4/16] %v1833, 128
      %1892 = vxpose.xlu0.b32.cont [5/16] %v1834, 128
      %1893 = vxpose.xlu0.b32.cont [6/16] %v1835, 128
      %1894 = vxpose.xlu0.b32.cont [7/16] %v1836, 128
      %1895 = vxpose.xlu0.b32.cont [8/16] %v1837, 128
      %1896 = vxpose.xlu0.b32.cont [9/16] %v1838, 128
      %1897 = vxpose.xlu0.b32.cont [10/16] %v1839, 128
      %1898 = vxpose.xlu0.b32.cont [11/16] %v1840, 128
      %1899 = vxpose.xlu0.b32.cont [12/16] %v1841, 128
      %1900 = vxpose.xlu0.b32.cont [13/16] %v1842, 128
      %1901 = vxpose.xlu0.b32.cont [14/16] %v1843, 128
      %1902 = vxpose.xlu0.b32.cont [15/16] %v1844, 128
      %1903 = vxpose.xlu0.b32.end [16/16] %v1845, 128
      %v1904 = vpop.trf.xlu0
      %v1905 = vpop.trf.xlu0
      %v1906 = vpop.trf.xlu0
      %v1907 = vpop.trf.xlu0
      %v1908 = vpop.trf.xlu0
      %v1909 = vpop.trf.xlu0
      %v1910 = vpop.trf.xlu0
      %v1911 = vpop.trf.xlu0
      %v1912 = vpop.trf.xlu0
      %v1913 = vpop.trf.xlu0
      %v1914 = vpop.trf.xlu0
      %v1915 = vpop.trf.xlu0
      %v1916 = vpop.trf.xlu0
      %v1917 = vpop.trf.xlu0
      %v1918 = vpop.trf.xlu0
      %v1919 = vpop.trf.xlu0
      %v1922 = vcombine.low %v1872, %v1904
      %v1924 = vunpack.c.l.s4 1983009808
      %v1925 = vunpack.c.0.s8 %v1924
      %v1926 = vlaneseq
      %v1927 = vshrl.u32 %v1926, 7
      %v1928 = vsub.s32 %v1925, %v1927
      %v1929 = vrot.slane %v1922, %v1928
      %1931 = vst [vmem:[%s251 + $0x4] sm:$0xf] %v1929
      %p1932 = scmp.lt.s32.totalorder %s17, 1
      %s1933 = scalar_select %p1932, %s17, 1
      %s1934 = smul.addr %s1933, 4
      %s1935 = smul.addr %s1934, 2
      %s1936 = scalar_lea.vmem %s6, %s1935
      // Predicated region
      $region45: #{inverted_residual_forward.1} parent=43 // pred_check
        %p1937 = pneg %p166
      $region46: #{inverted_residual_forward.1} parent=43 // pred_check_branch
        %1939 = sbr.rel (%p1937) target = $region48
      $region47: #{inverted_residual_forward.1} parent=43 // pred_region
        _
      $region48: #{inverted_residual_forward.1} parent=43 // pred_fallthru
        _
    $region44: #{inverted_residual_forward.1} parent=5 // pred_fallthru
      _
    %p1940 = scmp.le.s32.totalorder 2, %s12
    // Predicated region
    $region49: #{inverted_residual_forward.1} parent=5 // pred_check
      %p1941 = pneg %p1940
    $region50: #{inverted_residual_forward.1} parent=5 // pred_check_branch
      %1943 = sbr.rel (%p1941) target = $region52
    $region51: #{inverted_residual_forward.1} parent=5 // pred_region
      %s1944 = ssub.s32 %s12, 2
      // Predicated region
      $region53: #{inverted_residual_forward.1} parent=51 // pred_check
        %p1945 = pneg %p172
      $region54: #{inverted_residual_forward.1} parent=51 // pred_check_branch
        %1947 = sbr.rel (%p1945) target = $region56
      $region55: #{inverted_residual_forward.1} parent=51 // pred_region
        %p1948 = scmp.lt.s32.totalorder %s18, 1
        %s1949 = scalar_select %p1948, %s18, 1
        %s1950 = smul.addr %s1949, 4
        %s1951 = smul.addr %s1950, 2
        %s1952 = scalar_lea.vmem %s6, %s1951
      $region56: #{inverted_residual_forward.1} parent=51 // pred_fallthru
        _
    $region52: #{inverted_residual_forward.1} parent=5 // pred_fallthru
      _
  $region6: #{inverted_residual_forward.1} parent=0 // loop_footer
    %s16 = sadd.s32 1, %s12
  $region7: #{inverted_residual_forward.1} parent=0 // loop_footer_branch
    %11 = sbr.rel target = $region3
  $region8: #{inverted_residual_forward.1} parent=0 // loop_exit
    _

</llo_original>
